<compile_context>
chip_gen: v7x
topology: tpu7x:2x2x1
jax: 0.10.0
libtpu: 0.0.40
codegen_flags: <defaults>
</compile_context>

<pallas_src>
import jax
import jax.numpy as jnp
from jax.experimental import pallas as pl
from jax.experimental.pallas import tpu as pltpu


def _make_kernel(offsets, hw_ext, wp_a, wo, inv_hw, selfmod, use_abs):
    """Per-batch kernel (batch dim squeezed by the BlockSpec).

    Refs:
      x_ref     : (rows_in, K)        padded image, spatial flattened; K = Cin or kw*Cin
      w_ref     : (n_mm, K, Cout_p)   per-matmul weight slabs (Cout zero-padded)
      cbias_ref : (1, Cout_p)         conv bias
      scale_ref : (1, Cout_p)         learned scale (selfmod=False path)
      bias_ref  : (1, Cout_p)         modulation bias
      out_ref   : (hw_ext, Cout_p)
    """

    def kernel(x_ref, w_ref, cbias_ref, scale_ref, bias_ref, out_ref):
        # Conv as a few shifted-slice matmuls accumulated in a traced local f32 value
        # (no per-tap VMEM read-modify-write; the compiler chains the dot-adds).
        acc = None
        for t, off in enumerate(offsets):
            xs = x_ref[pl.ds(off, hw_ext), :]            # static, 8-aligned start
            part = jnp.dot(xs, w_ref[t], preferred_element_type=jnp.float32)
            acc = part if acc is None else acc + part

        cbias = cbias_ref[...]                           # (1, Cout_p) f32

        if selfmod:
            # Exact masked per-image/per-channel spatial mean of the conv output:
            # mean(conv) = sum(acc * meanw) + conv_bias, where meanw = 1/(Ho*Wo) on
            # the Wo valid columns of each padded-width row and 0 on garbage columns.
            col = jax.lax.broadcasted_iota(jnp.int32, (hw_ext, 1), 0) % wp_a
            meanw = jnp.where(col < wo, jnp.float32(inv_hw), jnp.float32(0.0))
            scale = jnp.sum(acc * meanw, axis=0, keepdims=True) + cbias
        else:
            scale = scale_ref[...]
        if use_abs:
            scale = jnp.abs(scale)

        # out = scale*(acc + cbias) + bias, folded so acc is the only full-tile operand.
        fused_bias = scale * cbias + bias_ref[...]       # (1, Cout_p)
        out_ref[...] = (acc * scale + fused_bias).astype(out_ref.dtype)

    return kernel


def custom_conv2d(x, conv_w, conv_b, mod_scale, mod_bias, *,
                  stride=1, pad=1, selfmod=True, use_abs=True,
                  compute_dtype=None, fold_kw=None, output_format="NCHW"):
    """CustomConv2d forward.  x: (N, Cin, H, W) NCHW; conv_w: (Cout, Cin, kh, kw).

    compute_dtype: optional matmul-operand dtype (jnp.bfloat16 recommended on every
      TPU generation incl. v5e; MXU accumulation and the epilogue remain float32).
    fold_kw: fold the kw width taps into the matmul K dim (default: Cin < 128).
    output_format: "NCHW" (module contract, default) or "NHWC" fast path that skips
      the final transpose (saves one output-sized HBM pass).
    """
    n, cin, h, w = x.shape
    cout, cin_w, kh, kw = conv_w.shape
    assert cin_w == cin
    if stride != 1:
        # TODO(synk): stride>1 / dilation / grouped conv of the wrapped nn.Conv2d are
        # not supported by the fused shifted-matmul path.
        raise NotImplementedError("custom_conv2d Pallas kernel supports stride=1 only")
    if output_format not in ("NCHW", "NHWC"):
        raise ValueError(f"bad output_format: {output_format}")
    if conv_b is None:
        conv_b = jnp.zeros((cout,), jnp.float32)
    if fold_kw is None:
        fold_kw = cin < 128

    hp, wp = h + 2 * pad, w + 2 * pad
    ho, wo = hp - kh + 1, wp - kw + 1
    wp_a = ((wp + 7) // 8) * 8              # sublane-aligned padded width
    hw_ext = ho * wp_a                      # conv computed over the full padded width
    cout_p = pl.cdiv(cout, 128) * 128       # lane-dense output / full MXU N width
    out_dtype = x.dtype

    # NCHW -> NHWC (Cin on the lane/K dim) + zero padding.  Width right-padded to
    # wp_a; one extra zero row at the bottom keeps every shifted slice in bounds.
    x_nhwc = jnp.transpose(x, (0, 2, 3, 1))
    x_pad = jnp.pad(x_nhwc, ((0, 0), (pad, pad + 1), (pad, wp_a - w - pad), (0, 0)))
    x_flat = x_pad.reshape(n, (hp + 1) * wp_a, cin)
    if compute_dtype is not None:
        x_flat = x_flat.astype(compute_dtype)

    if fold_kw:
        # Fold the kw width taps into K: each row of x_in holds the kw width-shifted
        # copies concatenated on the channel dim -> kh matmuls with K = kw*Cin.
        rows_in = hp * wp_a
        x_in = jnp.concatenate(
            [x_flat[:, j:j + rows_in, :] for j in range(kw)], axis=-1)
        k_in = kw * cin
        w_in = jnp.transpose(conv_w, (2, 3, 1, 0)).reshape(kh, kw * cin, cout)
        offsets = [i * wp_a for i in range(kh)]                      # all 8-aligned
    else:
        rows_in = (hp + 1) * wp_a
        x_in = x_flat
        k_in = cin
        w_in = jnp.transpose(conv_w, (2, 3, 1, 0)).reshape(kh * kw, cin, cout)
        offsets = [i * wp_a + j for i in range(kh) for j in range(kw)]
    n_mm = len(offsets)
    w_in = jnp.pad(w_in, ((0, 0), (0, 0), (0, cout_p - cout)))
    if compute_dtype is not None:
        w_in = w_in.astype(compute_dtype)

    cbias = jnp.pad(conv_b.astype(jnp.float32), (0, cout_p - cout)).reshape(1, cout_p)
    scale = jnp.pad(mod_scale.astype(jnp.float32), (0, cout_p - cout)).reshape(1, cout_p)
    bias = jnp.pad(mod_bias.astype(jnp.float32), (0, cout_p - cout)).reshape(1, cout_p)

    kernel = _make_kernel(offsets, hw_ext, wp_a, wo, 1.0 / float(ho * wo),
                          selfmod, use_abs)

    # Per-generation VMEM budget (~3/4 of physical VMEM) + fail-fast guard.
    try:
        vmem_cap = int(pltpu.get_tpu_info().vmem_capacity_bytes)
    except Exception:
        vmem_cap = 128 << 20
    vmem_budget = (3 * vmem_cap) // 4

    in_bpe = x_in.dtype.itemsize
    out_bpe = jnp.dtype(out_dtype).itemsize
    x_blk = rows_in * k_in * in_bpe
    out_blk = hw_ext * cout_p * out_bpe
    w_bytes = n_mm * k_in * cout_p * w_in.dtype.itemsize
    acc_live = hw_ext * cout_p * 4          # compiler-managed local f32 accumulator
    small = 3 * cout_p * 4
    vmem_need = 2 * x_blk + 2 * out_blk + 2 * w_bytes + acc_live + small + (1 << 20)
    if vmem_need > vmem_budget:
        # TODO(synk): Ho-row-tile grid with (kh-1) halo rows + two-pass selfmod mean
        # for large images instead of one whole-image block per grid step.
        raise NotImplementedError(
            f"per-image block needs ~{vmem_need >> 20} MiB VMEM > budget "
            f"{vmem_budget >> 20} MiB; row-tiled path not implemented")
    vmem_limit = int(min(max(int(1.5 * vmem_need), 16 << 20), vmem_budget))

    flops = 2 * n * hw_ext * k_in * n_mm * cout_p
    bytes_accessed = n * (x_blk + out_blk) + w_bytes + small
    cost = pl.CostEstimate(flops=int(flops), transcendentals=0,
                           bytes_accessed=int(bytes_accessed))

    out = pl.pallas_call(
        kernel,
        out_shape=jax.ShapeDtypeStruct((n, hw_ext, cout_p), out_dtype),
        grid_spec=pltpu.PrefetchScalarGridSpec(
            num_scalar_prefetch=0,
            grid=(n,),
            in_specs=[
                # batch dim squeezed (None) -> kernel sees 2D/3D VMEM refs
                pl.BlockSpec((None, rows_in, k_in), lambda b: (b, 0, 0)),
                pl.BlockSpec((n_mm, k_in, cout_p), lambda b: (0, 0, 0)),
                pl.BlockSpec((1, cout_p), lambda b: (0, 0)),
                pl.BlockSpec((1, cout_p), lambda b: (0, 0)),
                pl.BlockSpec((1, cout_p), lambda b: (0, 0)),
            ],
            out_specs=pl.BlockSpec((None, hw_ext, cout_p), lambda b: (b, 0, 0)),
        ),
        compiler_params=pltpu.CompilerParams(
            dimension_semantics=("parallel",),
            vmem_limit_bytes=vmem_limit),
        cost_estimate=cost,
    )(x_in, w_in, cbias, scale, bias)

    # Drop garbage width columns + padded channels.
    out = out.reshape(n, ho, wp_a, cout_p)[:, :, :wo, :cout]
    if output_format == "NHWC":
        return out
    return jnp.transpose(out, (0, 3, 1, 2))


def _reference(x, conv_w, conv_b, mod_scale, mod_bias, *,
               stride=1, pad=1, selfmod=True, use_abs=True):
    """Pure-JAX reference mirroring the PyTorch forward (NCHW)."""
    conv = jax.lax.conv_general_dilated(
        x, conv_w, window_strides=(stride, stride),
        padding=((pad, pad), (pad, pad)),
        dimension_numbers=("NCHW", "OIHW", "NCHW"))
    conv = conv + conv_b.reshape(1, -1, 1, 1)
    if selfmod:
        scale = conv.mean(axis=(2, 3))[:, :, None, None]
    else:
        scale = mod_scale.reshape(1, -1, 1, 1)
    if use_abs:
        scale = jnp.abs(scale)
    return scale * conv + mod_bias.reshape(1, -1, 1, 1)


if __name__ == "__main__":
    key = jax.random.PRNGKey(0)
    k1, k2, k3, k4 = jax.random.split(key, 4)

    N, Cin, H, W = 2, 4, 16, 16
    Cout, KH, KW = 8, 3, 3

    x = jax.random.normal(k1, (N, Cin, H, W), dtype=jnp.float32)
    conv_w = 0.1 * jax.random.normal(k2, (Cout, Cin, KH, KW), dtype=jnp.float32)
    conv_b = 0.05 * jax.random.normal(k3, (Cout,), dtype=jnp.float32)
    mod_scale = jax.random.normal(k4, (Cout,), dtype=jnp.float32)   # exercises abs()
    mod_bias = 0.1 * jnp.ones((Cout,), dtype=jnp.float32)

    ref = _reference(x, conv_w, conv_b, mod_scale, mod_bias,
                     stride=1, pad=1, selfmod=True, use_abs=True)

    # 1) f32, kw-folded path (default for small Cin) -- tight correctness check.
    out = jax.block_until_ready(
        custom_conv2d(x, conv_w, conv_b, mod_scale, mod_bias,
                      stride=1, pad=1, selfmod=True, use_abs=True))
    assert out.shape == (N, Cout, H, W)
    assert jnp.allclose(out, ref, atol=1e-5, rtol=1e-5), "f32 fold path mismatch"

    # 2) f32, per-tap (non-folded) path -- exercises the large-Cin variant.
    out_nf = jax.block_until_ready(
        custom_conv2d(x, conv_w, conv_b, mod_scale, mod_bias, fold_kw=False))
    assert jnp.allclose(out_nf, ref, atol=1e-5, rtol=1e-5), "f32 per-tap path mismatch"

    # 3) NHWC fast-path output (skips the wrapper's NCHW transpose pass).
    out_nhwc = jax.block_until_ready(
        custom_conv2d(x, conv_w, conv_b, mod_scale, mod_bias, output_format="NHWC"))
    assert jnp.allclose(out_nhwc, jnp.transpose(ref, (0, 2, 3, 1)),
                        atol=1e-5, rtol=1e-5), "NHWC path mismatch"

    # 4) bf16 matmul operands (valid on v5e/v6e/v7x; f32 accumulation/epilogue).
    out_bf16 = jax.block_until_ready(
        custom_conv2d(x, conv_w, conv_b, mod_scale, mod_bias,
                      compute_dtype=jnp.bfloat16))
    assert jnp.allclose(out_bf16, ref, atol=2e-2, rtol=2e-2), "bf16 path mismatch"

    # 5) selfmod=False (learned per-channel scale) path.
    ref_ns = _reference(x, conv_w, conv_b, mod_scale, mod_bias,
                        stride=1, pad=1, selfmod=False, use_abs=True)
    out_ns = jax.block_until_ready(
        custom_conv2d(x, conv_w, conv_b, mod_scale, mod_bias, selfmod=False))
    assert jnp.allclose(out_ns, ref_ns, atol=1e-5, rtol=1e-5), "selfmod=False mismatch"

    print("KERNEL_OK")
</pallas_src>

<mosaic_0001>
module attributes {stable_mosaic.version = 11 : i64} {
  func.func @kernel(%arg0: i32, %arg1: memref<1x432x12xf32, #tpu.memory_space<vmem>>, %arg2: memref<3x12x128xf32, #tpu.memory_space<vmem>>, %arg3: memref<1x128xf32, #tpu.memory_space<vmem>>, %arg4: memref<1x128xf32, #tpu.memory_space<vmem>>, %arg5: memref<1x128xf32, #tpu.memory_space<vmem>>, %arg6: memref<1x384x128xf32, #tpu.memory_space<vmem>>) attributes {dimension_semantics = [#tpu.dimension_semantics<parallel>], iteration_bounds = array<i64: 2>, scalar_prefetch = 0 : i64, scratch_operands = 0 : i64, tpu.core_type = #tpu.core_type<tc>, window_params = [{transform_indices = @transform_0, window_bounds = array<i64: 1, 432, 12>}, {pipeline_mode = #tpu.pipeline_mode<synchronous>, transform_indices = @transform_1, window_bounds = array<i64: 3, 12, 128>}, {pipeline_mode = #tpu.pipeline_mode<synchronous>, transform_indices = @transform_2, window_bounds = array<i64: 1, 128>}, {pipeline_mode = #tpu.pipeline_mode<synchronous>, transform_indices = @transform_3, window_bounds = array<i64: 1, 128>}, {pipeline_mode = #tpu.pipeline_mode<synchronous>, transform_indices = @transform_4, window_bounds = array<i64: 1, 128>}, {transform_indices = @transform_5, window_bounds = array<i64: 1, 384, 128>}]} {
    %c0 = arith.constant 0 : index
    %c0_0 = arith.constant 0 : index
    %c0_1 = arith.constant 0 : index
    %0 = vector.load %arg1[%c0, %c0_0, %c0_1] : memref<1x432x12xf32, #tpu.memory_space<vmem>>, vector<1x384x12xf32>
    %1 = vector.shape_cast %0 : vector<1x384x12xf32> to vector<384x12xf32>
    %c0_2 = arith.constant 0 : index
    %c0_3 = arith.constant 0 : index
    %c0_4 = arith.constant 0 : index
    %2 = vector.load %arg2[%c0_2, %c0_3, %c0_4] : memref<3x12x128xf32, #tpu.memory_space<vmem>>, vector<1x12x128xf32>
    %3 = vector.shape_cast %2 : vector<1x12x128xf32> to vector<12x128xf32>
    %cst = arith.constant dense<0.000000e+00> : vector<384x128xf32>
    %4 = tpu.matmul %1, %3, %cst {dimension_numbers = #tpu.dot_dimension_numbers<[1], [0], [0], [1], [0, 0, 1, 1], [], []>} : vector<384x12xf32>, vector<12x128xf32>, vector<384x128xf32> -> vector<384x128xf32>
    %c0_5 = arith.constant 0 : index
    %c24 = arith.constant 24 : index
    %c0_6 = arith.constant 0 : index
    %5 = vector.load %arg1[%c0_5, %c24, %c0_6] : memref<1x432x12xf32, #tpu.memory_space<vmem>>, vector<1x384x12xf32>
    %6 = vector.shape_cast %5 : vector<1x384x12xf32> to vector<384x12xf32>
    %c1 = arith.constant 1 : index
    %c0_7 = arith.constant 0 : index
    %c0_8 = arith.constant 0 : index
    %7 = vector.load %arg2[%c1, %c0_7, %c0_8] : memref<3x12x128xf32, #tpu.memory_space<vmem>>, vector<1x12x128xf32>
    %8 = vector.shape_cast %7 : vector<1x12x128xf32> to vector<12x128xf32>
    %cst_9 = arith.constant dense<0.000000e+00> : vector<384x128xf32>
    %9 = tpu.matmul %6, %8, %cst_9 {dimension_numbers = #tpu.dot_dimension_numbers<[1], [0], [0], [1], [0, 0, 1, 1], [], []>} : vector<384x12xf32>, vector<12x128xf32>, vector<384x128xf32> -> vector<384x128xf32>
    %10 = arith.addf %4, %9 : vector<384x128xf32>
    %c0_10 = arith.constant 0 : index
    %c48 = arith.constant 48 : index
    %c0_11 = arith.constant 0 : index
    %11 = vector.load %arg1[%c0_10, %c48, %c0_11] : memref<1x432x12xf32, #tpu.memory_space<vmem>>, vector<1x384x12xf32>
    %12 = vector.shape_cast %11 : vector<1x384x12xf32> to vector<384x12xf32>
    %c2 = arith.constant 2 : index
    %c0_12 = arith.constant 0 : index
    %c0_13 = arith.constant 0 : index
    %13 = vector.load %arg2[%c2, %c0_12, %c0_13] : memref<3x12x128xf32, #tpu.memory_space<vmem>>, vector<1x12x128xf32>
    %14 = vector.shape_cast %13 : vector<1x12x128xf32> to vector<12x128xf32>
    %cst_14 = arith.constant dense<0.000000e+00> : vector<384x128xf32>
    %15 = tpu.matmul %12, %14, %cst_14 {dimension_numbers = #tpu.dot_dimension_numbers<[1], [0], [0], [1], [0, 0, 1, 1], [], []>} : vector<384x12xf32>, vector<12x128xf32>, vector<384x128xf32> -> vector<384x128xf32>
    %16 = arith.addf %10, %15 : vector<384x128xf32>
    %c0_15 = arith.constant 0 : index
    %c0_16 = arith.constant 0 : index
    %17 = vector.load %arg3[%c0_15, %c0_16] : memref<1x128xf32, #tpu.memory_space<vmem>>, vector<1x128xf32>
    %18 = tpu.iota {dimensions = array<i32: 0>} : vector<384x1xi32>
    %c24_i32 = arith.constant 24 : i32
    %c0_i32 = arith.constant 0 : i32
    %19 = arith.cmpi eq, %c24_i32, %c0_i32 : i32
    %c1_i32 = arith.constant 1 : i32
    %20 = arith.select %19, %c1_i32, %c24_i32 : i32
    %21 = vector.broadcast %20 : i32 to vector<384x1xi32>
    %22 = arith.remsi %18, %21 : vector<384x1xi32>
    %c0_i32_17 = arith.constant 0 : i32
    %23 = vector.broadcast %c0_i32_17 : i32 to vector<384x1xi32>
    %24 = arith.cmpi ne, %22, %23 : vector<384x1xi32>
    %c0_i32_18 = arith.constant 0 : i32
    %25 = vector.broadcast %c0_i32_18 : i32 to vector<384x1xi32>
    %26 = arith.cmpi slt, %22, %25 : vector<384x1xi32>
    %c0_i32_19 = arith.constant 0 : i32
    %27 = arith.cmpi slt, %20, %c0_i32_19 : i32
    %28 = vector.broadcast %27 : i1 to vector<384x1xi1>
    %29 = vector.broadcast %28 : vector<384x1xi1> to vector<384x1xi1>
    %30 = arith.xori %26, %29 : vector<384x1xi1>
    %31 = arith.andi %30, %24 : vector<384x1xi1>
    %32 = vector.broadcast %20 : i32 to vector<384x1xi32>
    %33 = arith.addi %22, %32 : vector<384x1xi32>
    %34 = arith.select %31, %33, %22 : vector<384x1xi1>, vector<384x1xi32>
    %c16_i32 = arith.constant 16 : i32
    %35 = vector.broadcast %c16_i32 : i32 to vector<384x1xi32>
    %36 = arith.cmpi slt, %34, %35 : vector<384x1xi32>
    %cst_20 = arith.constant 3.906250e-03 : f32
    %cst_21 = arith.constant 0.000000e+00 : f32
    %37 = vector.broadcast %cst_20 : f32 to vector<384x1xf32>
    %38 = vector.broadcast %cst_21 : f32 to vector<384x1xf32>
    %39 = arith.select %36, %37, %38 : vector<384x1xi1>, vector<384x1xf32>
    %40 = vector.broadcast %39 : vector<384x1xf32> to vector<384x128xf32>
    %41 = arith.mulf %16, %40 : vector<384x128xf32>
    %cst_22 = arith.constant dense<0.000000e+00> : vector<128xf32>
    %42 = vector.multi_reduction <add>, %41, %cst_22 [0] : vector<384x128xf32> to vector<128xf32>
    %43 = vector.shape_cast %42 : vector<128xf32> to vector<1x128xf32>
    %44 = arith.addf %43, %17 : vector<1x128xf32>
    %45 = math.absf %44 : vector<1x128xf32>
    %46 = arith.mulf %45, %17 : vector<1x128xf32>
    %c0_23 = arith.constant 0 : index
    %c0_24 = arith.constant 0 : index
    %47 = vector.load %arg5[%c0_23, %c0_24] : memref<1x128xf32, #tpu.memory_space<vmem>>, vector<1x128xf32>
    %48 = arith.addf %46, %47 : vector<1x128xf32>
    %49 = vector.broadcast %45 : vector<1x128xf32> to vector<384x128xf32>
    %50 = arith.mulf %16, %49 : vector<384x128xf32>
    %51 = vector.broadcast %48 : vector<1x128xf32> to vector<384x128xf32>
    %52 = arith.addf %50, %51 : vector<384x128xf32>
    %c0_25 = arith.constant 0 : index
    %c0_26 = arith.constant 0 : index
    %c0_27 = arith.constant 0 : index
    %53 = vector.load %arg6[%c0_25, %c0_26, %c0_27] : memref<1x384x128xf32, #tpu.memory_space<vmem>>, vector<1x384x128xf32>
    %54 = vector.shape_cast %53 : vector<1x384x128xf32> to vector<384x128xf32>
    %55 = vector.shape_cast %52 : vector<384x128xf32> to vector<1x384x128xf32>
    tpu.vector_store %arg6[%c0_25, %c0_26, %c0_27], %55 {strides = array<i32>} : memref<1x384x128xf32, #tpu.memory_space<vmem>>, vector<1x384x128xf32>,
    return
  }
  func.func @transform_0(%arg0: i32) -> (i32, i32, i32) {
    %c0_i32 = arith.constant 0 : i32
    %c0_i32_0 = arith.constant 0 : i32
    %c0_i32_1 = arith.constant 0 : i32
    return %arg0, %c0_i32, %c0_i32_0 : i32, i32, i32
  }
  func.func @transform_1(%arg0: i32) -> (i32, i32, i32) {
    %c0_i32 = arith.constant 0 : i32
    %c0_i32_0 = arith.constant 0 : i32
    %c0_i32_1 = arith.constant 0 : i32
    %c0_i32_2 = arith.constant 0 : i32
    return %c0_i32, %c0_i32_0, %c0_i32_1 : i32, i32, i32
  }
  func.func @transform_2(%arg0: i32) -> (i32, i32) {
    %c0_i32 = arith.constant 0 : i32
    %c0_i32_0 = arith.constant 0 : i32
    %c0_i32_1 = arith.constant 0 : i32
    return %c0_i32, %c0_i32_0 : i32, i32
  }
  func.func @transform_3(%arg0: i32) -> (i32, i32) {
    %c0_i32 = arith.constant 0 : i32
    %c0_i32_0 = arith.constant 0 : i32
    %c0_i32_1 = arith.constant 0 : i32
    return %c0_i32, %c0_i32_0 : i32, i32
  }
  func.func @transform_4(%arg0: i32) -> (i32, i32) {
    %c0_i32 = arith.constant 0 : i32
    %c0_i32_0 = arith.constant 0 : i32
    %c0_i32_1 = arith.constant 0 : i32
    return %c0_i32, %c0_i32_0 : i32, i32
  }
  func.func @transform_5(%arg0: i32) -> (i32, i32, i32) {
    %c0_i32 = arith.constant 0 : i32
    %c0_i32_0 = arith.constant 0 : i32
    %c0_i32_1 = arith.constant 0 : i32
    return %arg0, %c0_i32, %c0_i32_0 : i32, i32, i32
  }
}

</mosaic_0001>

<llo_original>
// kernel: tpu_custom_call.1
$region0: #{tpu_custom_call.1}
  #allocation0 [shape = 'u32[]', space=smem, size = 0x4, offset = 0x4, fixed_abs, tag = 'smem constant byte address 0x4 - core index']
  #allocation1 [shape = 'u32[144,128]{1,0:T(1,128)}', space=vmem, size = 0x12000, scoped, tag = 'internal scratch']
  %s0 = inlined_call_operand.vmem [shape: f32[2,432,12], index: 0, kind: input, shape index: {}]
  %s1 = inlined_call_operand.vmem [shape: f32[3,12,128], index: 1, kind: input, shape index: {}]
  %s2 = inlined_call_operand.vmem [shape: f32[1,128], index: 2, kind: input, shape index: {}]
  %s3 = inlined_call_operand.vmem [shape: f32[1,128], index: 3, kind: input, shape index: {}]
  %s4 = inlined_call_operand.vmem [shape: f32[1,128], index: 4, kind: input, shape index: {}]
  %s5 = inlined_call_operand.hbm [shape: f32[2,384,128], index: 5, kind: output, shape index: {}]
  %s6 = sld [smem:[#allocation0]]
  $region53: #{tpu_custom_call.1} parent=0
    _
  %s8 = ssub.s32 1, %s6
  %s9 = scalar_select 0, %s8, %s6
  $region1: #{tpu_custom_call.1} parent=0
    #allocation2 [shape = 'u8[393216]{0}', space=vmem, size = 0x60000, scoped, tag = 'output window, operand 0']
    #allocation3 [shape = 's32[2]{0}', space=sflag, size = 0x8, scoped, tag = 'scoped memory for tpu_custom_call.1']
    %10 = vsyncpa [#allocation3], 0
    %s11 = scalar_lea.sflag [#allocation3], 1
    %12 = vsyncpa %s11, 0
    loop: start=0, step=1, limit=4
    $region2: #{tpu_custom_call.1} parent=1 // loop_pre_header
      _
    $region3: #{tpu_custom_call.1} parent=1 // loop_header
      %s14 = sphi 0, %s18
      %p15 = scmp.ge.s32.totalorder %s14, 4
      %s24 = sphi 0, %s26
      %s27 = sphi 0, %s24
      %s28 = sphi 0, %s27
      %s44 = sphi 0, %s28
      %s48 = sphi 0, %s48
      %s50 = sphi 0, %s48
      %s51 = sphi 0, %s50
      %s65 = sphi 0, %s51
      %s69 = sphi 0, %s69
      %s71 = sphi 0, %s69
      %s72 = sphi 0, %s71
      %s86 = sphi 0, %s72
      %s90 = sphi 0, %s90
      %s92 = sphi 0, %s90
      %s93 = sphi 0, %s92
      %s107 = sphi 0, %s93
      %s111 = sphi 0, %s111
      %s113 = sphi 0, %s111
      %s114 = sphi 0, %s113
      %s128 = sphi 0, %s114
      %s134 = sphi 0, %s136
      %s137 = sphi 0, %s134
      %s138 = sphi 0, %s137
      %s154 = sphi 0, %s138
    $region4: #{tpu_custom_call.1} parent=1 // loop_header_branch
      %17 = sbr.rel (%p15) target = $region8
    $region5: #{tpu_custom_call.1} parent=1 // loop_body
      %s19 = ssub.s32 %s14, 1
      %s20 = ssub.s32 %s14, 2
      %s21 = sadd.s32 %s14, 1
      %s22 = ssub.s32 %s14, %s21
      %p23 = scmp.eq.s32.totalorder %s22, 0
      %s25 = sadd.s32 %s24, 1
      %s26 = scalar_select %p23, %s24, %s25
      %p29 = pneg %p23
      %p30 = scmp.eq.s32.totalorder %s14, 1
      %p31 = por %p29, %p30
      %p32 = scmp.ne.s32.totalorder %s24, %s27
      %p33 = scmp.eq.s32.totalorder %s14, 0
      %p34 = por %p32, %p33
      %p35 = scmp.ne.s32.totalorder %s24, %s27
      %p36 = scmp.eq.s32.totalorder %s19, 1
      %p37 = por %p35, %p36
      %p38 = scmp.ne.s32.totalorder %s27, %s28
      %p39 = scmp.eq.s32.totalorder %s19, 0
      %p40 = por %p38, %p39
      %p41 = scmp.ne.s32.totalorder %s27, %s28
      %p42 = scmp.eq.s32.totalorder %s20, 1
      %p43 = por %p41, %p42
      %p45 = scmp.ne.s32.totalorder %s28, %s44
      %p46 = scmp.eq.s32.totalorder %s20, 0
      %p47 = por %p45, %p46
      %s49 = sadd.s32 %s48, 1
      %p52 = scmp.eq.s32.totalorder %s14, 1
      %p53 = scmp.ne.s32.totalorder %s48, %s50
      %p54 = scmp.eq.s32.totalorder %s14, 0
      %p55 = por %p53, %p54
      %p56 = scmp.ne.s32.totalorder %s48, %s50
      %p57 = scmp.eq.s32.totalorder %s19, 1
      %p58 = por %p56, %p57
      %p59 = scmp.ne.s32.totalorder %s50, %s51
      %p60 = scmp.eq.s32.totalorder %s19, 0
      %p61 = por %p59, %p60
      %p62 = scmp.ne.s32.totalorder %s50, %s51
      %p63 = scmp.eq.s32.totalorder %s20, 1
      %p64 = por %p62, %p63
      %p66 = scmp.ne.s32.totalorder %s51, %s65
      %p67 = scmp.eq.s32.totalorder %s20, 0
      %p68 = por %p66, %p67
      %s70 = sadd.s32 %s69, 1
      %p73 = scmp.eq.s32.totalorder %s14, 1
      %p74 = scmp.ne.s32.totalorder %s69, %s71
      %p75 = scmp.eq.s32.totalorder %s14, 0
      %p76 = por %p74, %p75
      %p77 = scmp.ne.s32.totalorder %s69, %s71
      %p78 = scmp.eq.s32.totalorder %s19, 1
      %p79 = por %p77, %p78
      %p80 = scmp.ne.s32.totalorder %s71, %s72
      %p81 = scmp.eq.s32.totalorder %s19, 0
      %p82 = por %p80, %p81
      %p83 = scmp.ne.s32.totalorder %s71, %s72
      %p84 = scmp.eq.s32.totalorder %s20, 1
      %p85 = por %p83, %p84
      %p87 = scmp.ne.s32.totalorder %s72, %s86
      %p88 = scmp.eq.s32.totalorder %s20, 0
      %p89 = por %p87, %p88
      %s91 = sadd.s32 %s90, 1
      %p94 = scmp.eq.s32.totalorder %s14, 1
      %p95 = scmp.ne.s32.totalorder %s90, %s92
      %p96 = scmp.eq.s32.totalorder %s14, 0
      %p97 = por %p95, %p96
      %p98 = scmp.ne.s32.totalorder %s90, %s92
      %p99 = scmp.eq.s32.totalorder %s19, 1
      %p100 = por %p98, %p99
      %p101 = scmp.ne.s32.totalorder %s92, %s93
      %p102 = scmp.eq.s32.totalorder %s19, 0
      %p103 = por %p101, %p102
      %p104 = scmp.ne.s32.totalorder %s92, %s93
      %p105 = scmp.eq.s32.totalorder %s20, 1
      %p106 = por %p104, %p105
      %p108 = scmp.ne.s32.totalorder %s93, %s107
      %p109 = scmp.eq.s32.totalorder %s20, 0
      %p110 = por %p108, %p109
      %s112 = sadd.s32 %s111, 1
      %p115 = scmp.eq.s32.totalorder %s14, 1
      %p116 = scmp.ne.s32.totalorder %s111, %s113
      %p117 = scmp.eq.s32.totalorder %s14, 0
      %p118 = por %p116, %p117
      %p119 = scmp.ne.s32.totalorder %s111, %s113
      %p120 = scmp.eq.s32.totalorder %s19, 1
      %p121 = por %p119, %p120
      %p122 = scmp.ne.s32.totalorder %s113, %s114
      %p123 = scmp.eq.s32.totalorder %s19, 0
      %p124 = por %p122, %p123
      %p125 = scmp.ne.s32.totalorder %s113, %s114
      %p126 = scmp.eq.s32.totalorder %s20, 1
      %p127 = por %p125, %p126
      %p129 = scmp.ne.s32.totalorder %s114, %s128
      %p130 = scmp.eq.s32.totalorder %s20, 0
      %p131 = por %p129, %p130
      %s132 = ssub.s32 %s14, %s21
      %p133 = scmp.eq.s32.totalorder %s132, 0
      %s135 = sadd.s32 %s134, 1
      %s136 = scalar_select %p133, %s134, %s135
      %p139 = pneg %p133
      %p140 = scmp.eq.s32.totalorder %s14, 1
      %p141 = por %p139, %p140
      %p142 = scmp.ne.s32.totalorder %s134, %s137
      %p143 = scmp.eq.s32.totalorder %s14, 0
      %p144 = por %p142, %p143
      %p145 = scmp.ne.s32.totalorder %s134, %s137
      %p146 = scmp.eq.s32.totalorder %s19, 1
      %p147 = por %p145, %p146
      %p148 = scmp.ne.s32.totalorder %s137, %s138
      %p149 = scmp.eq.s32.totalorder %s19, 0
      %p150 = por %p148, %p149
      %p151 = scmp.ne.s32.totalorder %s137, %s138
      %p152 = scmp.eq.s32.totalorder %s20, 1
      %p153 = por %p151, %p152
      %p155 = scmp.ne.s32.totalorder %s138, %s154
      %p156 = scmp.eq.s32.totalorder %s20, 0
      %p157 = por %p155, %p156
      %p158 = scmp.le.s32.totalorder 1, %s14
      %p159 = scmp.lt.s32.totalorder %s14, 3
      %p160 = pnand %p158, %p159
      %p161 = pneg %p160
      // Predicated region
      $region9: #{tpu_custom_call.1} parent=5 // pred_check
        _
      $region10: #{tpu_custom_call.1} parent=5 // pred_check_branch
        %163 = sbr.rel (%p160) target = $region12
      $region11: #{tpu_custom_call.1} parent=5 // pred_region
        %s164 = ssub.s32 %s14, 1
        // Predicated region
        $region13: #{tpu_custom_call.1} parent=11 // pred_check
          %p165 = pneg %p61
        $region14: #{tpu_custom_call.1} parent=11 // pred_check_branch
          %167 = sbr.rel (%p165) target = $region16
        $region15: #{tpu_custom_call.1} parent=11 // pred_region
          _
        $region16: #{tpu_custom_call.1} parent=11 // pred_fallthru
          _
        // Predicated region
        $region17: #{tpu_custom_call.1} parent=11 // pred_check
          %p168 = pneg %p82
        $region18: #{tpu_custom_call.1} parent=11 // pred_check_branch
          %170 = sbr.rel (%p168) target = $region20
        $region19: #{tpu_custom_call.1} parent=11 // pred_region
          _
        $region20: #{tpu_custom_call.1} parent=11 // pred_fallthru
          _
        // Predicated region
        $region21: #{tpu_custom_call.1} parent=11 // pred_check
          %p171 = pneg %p103
        $region22: #{tpu_custom_call.1} parent=11 // pred_check_branch
          %173 = sbr.rel (%p171) target = $region24
        $region23: #{tpu_custom_call.1} parent=11 // pred_region
          _
        $region24: #{tpu_custom_call.1} parent=11 // pred_fallthru
          _
        // Predicated region
        $region25: #{tpu_custom_call.1} parent=11 // pred_check
          %p174 = pneg %p124
        $region26: #{tpu_custom_call.1} parent=11 // pred_check_branch
          %176 = sbr.rel (%p174) target = $region28
        $region27: #{tpu_custom_call.1} parent=11 // pred_region
          _
        $region28: #{tpu_custom_call.1} parent=11 // pred_fallthru
          _
      $region12: #{tpu_custom_call.1} parent=5 // pred_fallthru
        _
      %p177 = scmp.lt.s32.totalorder %s14, 2
      // Predicated region
      $region29: #{tpu_custom_call.1} parent=5 // pred_check
        %p178 = pneg %p177
      $region30: #{tpu_custom_call.1} parent=5 // pred_check_branch
        %180 = sbr.rel (%p178) target = $region32
      $region31: #{tpu_custom_call.1} parent=5 // pred_region
        // Predicated region
        $region33: #{tpu_custom_call.1} parent=31 // pred_check
          %p181 = pneg %p34
        $region34: #{tpu_custom_call.1} parent=31 // pred_check_branch
          %183 = sbr.rel (%p181) target = $region36
        $region35: #{tpu_custom_call.1} parent=31 // pred_region
          %p184 = scmp.lt.s32.totalorder %s14, 1
          %s185 = scalar_select %p184, %s14, 1
          %s186 = smul.addr %s185, 54
          %s187 = smul.addr %s186, 8
          %s188 = scalar_lea.vmem %s0, %s187
        $region36: #{tpu_custom_call.1} parent=31 // pred_fallthru
          _
      $region32: #{tpu_custom_call.1} parent=5 // pred_fallthru
        _
      %p189 = scmp.le.s32.totalorder 1, %s14
      %p190 = scmp.lt.s32.totalorder %s14, 3
      %p191 = pnand %p189, %p190
      %p192 = pneg %p191
      // Predicated region
      $region37: #{tpu_custom_call.1} parent=5 // pred_check
        _
      $region38: #{tpu_custom_call.1} parent=5 // pred_check_branch
        %194 = sbr.rel (%p191) target = $region40
      $region39: #{tpu_custom_call.1} parent=5 // pred_region
        %s195 = ssub.s32 %s14, 1
        %p196 = scmp.lt.s32.totalorder %s19, 1
        %s197 = scalar_select %p196, %s19, 1
        %s198 = smul.addr %s197, 54
        %s199 = smul.addr %s198, 8
        %s200 = scalar_lea.vmem %s0, %s199
        %p201 = pneg %p40
        %p202 = pneg %p37
        %p203 = pneg %p61
        %p204 = pneg %p58
        %p205 = pneg %p82
        %p206 = pneg %p79
        %p207 = pneg %p103
        %p208 = pneg %p100
        %p209 = pneg %p124
        %p210 = pneg %p121
        %p211 = pneg %p150
        %p212 = pneg %p147
        %s213 = sand.u32 %s137, 1
        %s214 = scalar_lea.sflag [#allocation3], %s213
        %s215 = sand.u32 %s137, 1
        %s216 = smul.addr %s215, 384
        %s217 = scalar_lea.vmem [#allocation2], %s216
        %p218 = scmp.lt.s32.totalorder %s19, 1
        %s219 = scalar_select %p218, %s19, 1
        %s220 = smul.addr %s219, 54
        %s221 = smul.addr %s220, 8
        %s222 = scalar_lea.vmem %s0, %s221
        %v223 = vld [vmem:[%s222] sm:$0xff]
        %v224 = vld [vmem:[%s222 + $0x8] sm:$0xff]
        %v225 = vld [vmem:[%s222 + $0x10] sm:$0xff]
        %v226 = vld [vmem:[%s222 + $0x18] sm:$0xff]
        %v227 = vld [vmem:[%s222 + $0x20] sm:$0xff]
        %v228 = vld [vmem:[%s222 + $0x28] sm:$0xff]
        %v229 = vld [vmem:[%s222 + $0x30] sm:$0xff]
        %v230 = vld [vmem:[%s222 + $0x38] sm:$0xff]
        %v231 = vld [vmem:[%s222 + $0x40] sm:$0xff]
        %v232 = vld [vmem:[%s222 + $0x48] sm:$0xff]
        %v233 = vld [vmem:[%s222 + $0x50] sm:$0xff]
        %v234 = vld [vmem:[%s222 + $0x58] sm:$0xff]
        %v235 = vld [vmem:[%s222 + $0x60] sm:$0xff]
        %v236 = vld [vmem:[%s222 + $0x68] sm:$0xff]
        %v237 = vld [vmem:[%s222 + $0x70] sm:$0xff]
        %v238 = vld [vmem:[%s222 + $0x78] sm:$0xff]
        %v239 = vld [vmem:[%s222 + $0x80] sm:$0xff]
        %v240 = vld [vmem:[%s222 + $0x88] sm:$0xff]
        %v241 = vld [vmem:[%s222 + $0x90] sm:$0xff]
        %v242 = vld [vmem:[%s222 + $0x98] sm:$0xff]
        %v243 = vld [vmem:[%s222 + $0xa0] sm:$0xff]
        %v244 = vld [vmem:[%s222 + $0xa8] sm:$0xff]
        %v245 = vld [vmem:[%s222 + $0xb0] sm:$0xff]
        %v246 = vld [vmem:[%s222 + $0xb8] sm:$0xff]
        %v247 = vld [vmem:[%s222 + $0xc0] sm:$0xff]
        %v248 = vld [vmem:[%s222 + $0xc8] sm:$0xff]
        %v249 = vld [vmem:[%s222 + $0xd0] sm:$0xff]
        %v250 = vld [vmem:[%s222 + $0xd8] sm:$0xff]
        %v251 = vld [vmem:[%s222 + $0xe0] sm:$0xff]
        %v252 = vld [vmem:[%s222 + $0xe8] sm:$0xff]
        %v253 = vld [vmem:[%s222 + $0xf0] sm:$0xff]
        %v254 = vld [vmem:[%s222 + $0xf8] sm:$0xff]
        %v255 = vld [vmem:[%s222 + $0x100] sm:$0xff]
        %v256 = vld [vmem:[%s222 + $0x108] sm:$0xff]
        %v257 = vld [vmem:[%s222 + $0x110] sm:$0xff]
        %v258 = vld [vmem:[%s222 + $0x118] sm:$0xff]
        %v259 = vld [vmem:[%s222 + $0x120] sm:$0xff]
        %v260 = vld [vmem:[%s222 + $0x128] sm:$0xff]
        %v261 = vld [vmem:[%s222 + $0x130] sm:$0xff]
        %v262 = vld [vmem:[%s222 + $0x138] sm:$0xff]
        %v263 = vld [vmem:[%s222 + $0x140] sm:$0xff]
        %v264 = vld [vmem:[%s222 + $0x148] sm:$0xff]
        %v265 = vld [vmem:[%s222 + $0x150] sm:$0xff]
        %v266 = vld [vmem:[%s222 + $0x158] sm:$0xff]
        %v267 = vld [vmem:[%s222 + $0x160] sm:$0xff]
        %v268 = vld [vmem:[%s222 + $0x168] sm:$0xff]
        %v269 = vld [vmem:[%s222 + $0x170] sm:$0xff]
        %v270 = vld [vmem:[%s222 + $0x178] sm:$0xff]
        %v271 = vld [vmem:[%s1] sm:$0xff]
        %v272 = vld [vmem:[%s1 + $0x8] sm:$0xf]
        %v273 = vld [vmem:[%s222 + $0x180] sm:$0xff]
        %v274 = vld [vmem:[%s222 + $0x188] sm:$0xff]
        %v275 = vld [vmem:[%s222 + $0x190] sm:$0xff]
        %s276 = scalar_lea.vmem %s1, 16
        %v277 = vld [vmem:[%s276] sm:$0xff]
        %v278 = vld [vmem:[%s276 + $0x8] sm:$0xf]
        %vm279 = vcmask 97280
        %v281 = vsel %vm279, %v226, 0
        %v284 = vsel %vm279, %v227, 0
        %v287 = vsel %vm279, %v228, 0
        %v290 = vsel %vm279, %v229, 0
        %v293 = vsel %vm279, %v230, 0
        %v296 = vsel %vm279, %v231, 0
        %v299 = vsel %vm279, %v232, 0
        %v302 = vsel %vm279, %v233, 0
        %v305 = vsel %vm279, %v234, 0
        %v308 = vsel %vm279, %v235, 0
        %v311 = vsel %vm279, %v236, 0
        %v314 = vsel %vm279, %v237, 0
        %v317 = vsel %vm279, %v238, 0
        %v320 = vsel %vm279, %v239, 0
        %v323 = vsel %vm279, %v240, 0
        %v326 = vsel %vm279, %v241, 0
        %v329 = vsel %vm279, %v242, 0
        %v332 = vsel %vm279, %v243, 0
        %v335 = vsel %vm279, %v244, 0
        %v338 = vsel %vm279, %v245, 0
        %v341 = vsel %vm279, %v246, 0
        %v344 = vsel %vm279, %v247, 0
        %v347 = vsel %vm279, %v248, 0
        %v350 = vsel %vm279, %v249, 0
        %v353 = vsel %vm279, %v250, 0
        %v356 = vsel %vm279, %v251, 0
        %v359 = vsel %vm279, %v252, 0
        %v362 = vsel %vm279, %v253, 0
        %v365 = vsel %vm279, %v254, 0
        %v368 = vsel %vm279, %v255, 0
        %v371 = vsel %vm279, %v256, 0
        %v374 = vsel %vm279, %v257, 0
        %v377 = vsel %vm279, %v258, 0
        %v380 = vsel %vm279, %v259, 0
        %v383 = vsel %vm279, %v260, 0
        %v386 = vsel %vm279, %v261, 0
        %v389 = vsel %vm279, %v262, 0
        %v392 = vsel %vm279, %v263, 0
        %v395 = vsel %vm279, %v264, 0
        %v398 = vsel %vm279, %v265, 0
        %v401 = vsel %vm279, %v266, 0
        %v404 = vsel %vm279, %v267, 0
        %v407 = vsel %vm279, %v268, 0
        %v410 = vsel %vm279, %v269, 0
        %v413 = vsel %vm279, %v270, 0
        %v416 = vsel %vm279, %v273, 0
        %v419 = vsel %vm279, %v274, 0
        %v422 = vsel %vm279, %v275, 0
        %vm424 = vcmask 1043456
        %v426 = vsel %vm424, %v278, 0
        %428 = vmatprep.subr.mxu0 0.0
        %429 = vmatpush1.msra.mxu0 %v277
        %430 = vmatprep.subr.mxu0 0.0
        %431 = vmatpush1.msra.mxu0 %v426
        %432 = vmatprep.subr.mxu0 0.0
        %433 = vmatpush1.msra.mxu0 0.0
        %434 = vmatprep.subr.mxu0 0.0
        %435 = vmatpush1.msra.mxu0 0.0
        %436 = vmatprep.subr.mxu0 0.0
        %437 = vmatpush1.msra.mxu0 0.0
        %438 = vmatprep.subr.mxu0 0.0
        %439 = vmatpush1.msra.mxu0 0.0
        %440 = vmatprep.subr.mxu0 0.0
        %441 = vmatpush1.msra.mxu0 0.0
        %442 = vmatprep.subr.mxu0 0.0
        %443 = vmatpush1.msra.mxu0 0.0
        %444 = vmatprep.subr.mxu0 0.0
        %445 = vmatpush1.msra.mxu0 0.0
        %446 = vmatprep.subr.mxu0 0.0
        %447 = vmatpush1.msra.mxu0 0.0
        %448 = vmatprep.subr.mxu0 0.0
        %449 = vmatpush1.msra.mxu0 0.0
        %450 = vmatprep.subr.mxu0 0.0
        %451 = vmatpush1.msra.mxu0 0.0
        %452 = vmatprep.subr.mxu0 0.0
        %453 = vmatpush1.msra.mxu0 0.0
        %454 = vmatprep.subr.mxu0 0.0
        %455 = vmatpush1.msra.mxu0 0.0
        %456 = vmatprep.subr.mxu0 0.0
        %457 = vmatpush1.msra.mxu0 0.0
        %458 = vmatprep.subr.mxu0 0.0
        %459 = vmatpush1.msra.mxu0 0.0
        %460 = vmatprep.subr.mxu0 0.0
        %461 = vmatpush1.msra.mxu0 0.0
        %462 = vmatprep.subr.mxu0 0.0
        %463 = vmatpush1.msra.mxu0 0.0
        %464 = vmatprep.subr.mxu0 0.0
        %465 = vmatpush1.msra.mxu0 0.0
        %466 = vmatprep.subr.mxu0 0.0
        %467 = vmatpush1.msra.mxu0 0.0
        %468 = vmatprep.subr.mxu0 0.0
        %469 = vmatpush1.msra.mxu0 0.0
        %470 = vmatprep.subr.mxu0 0.0
        %471 = vmatpush1.msra.mxu0 0.0
        %472 = vmatprep.subr.mxu0 0.0
        %473 = vmatpush1.msra.mxu0 0.0
        %474 = vmatprep.subr.mxu0 0.0
        %475 = vmatpush1.msra.mxu0 0.0
        %476 = vmatprep.subr.mxu0 0.0
        %477 = vmatpush1.msra.mxu0 0.0
        %478 = vmatprep.subr.mxu0 0.0
        %479 = vmatpush1.msra.mxu0 0.0
        %480 = vmatprep.subr.mxu0 0.0
        %481 = vmatpush1.msra.mxu0 0.0
        %482 = vmatprep.subr.mxu0 0.0
        %483 = vmatpush1.msra.mxu0 0.0
        %484 = vmatprep.subr.mxu0 0.0
        %485 = vmatpush1.msra.mxu0 0.0
        %486 = vmatprep.subr.mxu0 0.0
        %487 = vmatpush1.msra.mxu0 0.0
        %488 = vmatprep.subr.mxu0 0.0
        %489 = vmatpush1.msra.mxu0 0.0
        %490 = vmatprep.subr.mxu0 0.0
        %491 = vmatpush1.msra.mxu0 0.0
        %492 = vmatprep.mubr.f32.mxu0 0.0
        %493 = vmatmul.mubr.f32.gmra.mrb[0].mxu0 %v281
        %v494 = vpop.f32.mrb[0].mxu0
        %v495 = vadd.f32 0.0, %v494
        %v496 = vpop.f32.mrb[0].mxu0
        %497 = vmatprep.mubr.f32.mxu0 0.0
        %498 = vmatmul.mubr.f32.gmra.mrb[0].mxu0 %v284
        %v499 = vpop.f32.mrb[0].mxu0
        %v500 = vadd.f32 0.0, %v499
        %v501 = vpop.f32.mrb[0].mxu0
        %502 = vmatprep.mubr.f32.mxu0 0.0
        %503 = vmatmul.mubr.f32.gmra.mrb[0].mxu0 %v287
        %v504 = vpop.f32.mrb[0].mxu0
        %v505 = vadd.f32 0.0, %v504
        %v506 = vpop.f32.mrb[0].mxu0
        %507 = vmatprep.mubr.f32.mxu0 0.0
        %508 = vmatmul.mubr.f32.gmra.mrb[0].mxu0 %v290
        %v509 = vpop.f32.mrb[0].mxu0
        %v510 = vadd.f32 0.0, %v509
        %v511 = vpop.f32.mrb[0].mxu0
        %512 = vmatprep.mubr.f32.mxu0 0.0
        %513 = vmatmul.mubr.f32.gmra.mrb[0].mxu0 %v293
        %v514 = vpop.f32.mrb[0].mxu0
        %v515 = vadd.f32 0.0, %v514
        %v516 = vpop.f32.mrb[0].mxu0
        %517 = vmatprep.mubr.f32.mxu0 0.0
        %518 = vmatmul.mubr.f32.gmra.mrb[0].mxu0 %v296
        %v519 = vpop.f32.mrb[0].mxu0
        %v520 = vadd.f32 0.0, %v519
        %v521 = vpop.f32.mrb[0].mxu0
        %522 = vmatprep.mubr.f32.mxu0 0.0
        %523 = vmatmul.mubr.f32.gmra.mrb[0].mxu0 %v299
        %v524 = vpop.f32.mrb[0].mxu0
        %v525 = vadd.f32 0.0, %v524
        %v526 = vpop.f32.mrb[0].mxu0
        %527 = vmatprep.mubr.f32.mxu0 0.0
        %528 = vmatmul.mubr.f32.gmra.mrb[0].mxu0 %v302
        %v529 = vpop.f32.mrb[0].mxu0
        %v530 = vadd.f32 0.0, %v529
        %v531 = vpop.f32.mrb[0].mxu0
        %532 = vmatprep.mubr.f32.mxu0 0.0
        %533 = vmatmul.mubr.f32.gmra.mrb[0].mxu0 %v305
        %v534 = vpop.f32.mrb[0].mxu0
        %v535 = vadd.f32 0.0, %v534
        %v536 = vpop.f32.mrb[0].mxu0
        %537 = vmatprep.mubr.f32.mxu0 0.0
        %538 = vmatmul.mubr.f32.gmra.mrb[0].mxu0 %v308
        %v539 = vpop.f32.mrb[0].mxu0
        %v540 = vadd.f32 0.0, %v539
        %v541 = vpop.f32.mrb[0].mxu0
        %542 = vmatprep.mubr.f32.mxu0 0.0
        %543 = vmatmul.mubr.f32.gmra.mrb[0].mxu0 %v311
        %v544 = vpop.f32.mrb[0].mxu0
        %v545 = vadd.f32 0.0, %v544
        %v546 = vpop.f32.mrb[0].mxu0
        %547 = vmatprep.mubr.f32.mxu0 0.0
        %548 = vmatmul.mubr.f32.gmra.mrb[0].mxu0 %v314
        %v549 = vpop.f32.mrb[0].mxu0
        %v550 = vadd.f32 0.0, %v549
        %v551 = vpop.f32.mrb[0].mxu0
        %552 = vmatprep.mubr.f32.mxu0 0.0
        %553 = vmatmul.mubr.f32.gmra.mrb[0].mxu0 %v317
        %v554 = vpop.f32.mrb[0].mxu0
        %v555 = vadd.f32 0.0, %v554
        %v556 = vpop.f32.mrb[0].mxu0
        %557 = vmatprep.mubr.f32.mxu0 0.0
        %558 = vmatmul.mubr.f32.gmra.mrb[0].mxu0 %v320
        %v559 = vpop.f32.mrb[0].mxu0
        %v560 = vadd.f32 0.0, %v559
        %v561 = vpop.f32.mrb[0].mxu0
        %562 = vmatprep.mubr.f32.mxu0 0.0
        %563 = vmatmul.mubr.f32.gmra.mrb[0].mxu0 %v323
        %v564 = vpop.f32.mrb[0].mxu0
        %v565 = vadd.f32 0.0, %v564
        %v566 = vpop.f32.mrb[0].mxu0
        %567 = vmatprep.mubr.f32.mxu0 0.0
        %568 = vmatmul.mubr.f32.gmra.mrb[0].mxu0 %v326
        %v569 = vpop.f32.mrb[0].mxu0
        %v570 = vadd.f32 0.0, %v569
        %v571 = vpop.f32.mrb[0].mxu0
        %572 = vmatprep.mubr.f32.mxu0 0.0
        %573 = vmatmul.mubr.f32.gmra.mrb[0].mxu0 %v329
        %v574 = vpop.f32.mrb[0].mxu0
        %v575 = vadd.f32 0.0, %v574
        %v576 = vpop.f32.mrb[0].mxu0
        %577 = vmatprep.mubr.f32.mxu0 0.0
        %578 = vmatmul.mubr.f32.gmra.mrb[0].mxu0 %v332
        %v579 = vpop.f32.mrb[0].mxu0
        %v580 = vadd.f32 0.0, %v579
        %v581 = vpop.f32.mrb[0].mxu0
        %582 = vmatprep.mubr.f32.mxu0 0.0
        %583 = vmatmul.mubr.f32.gmra.mrb[0].mxu0 %v335
        %v584 = vpop.f32.mrb[0].mxu0
        %v585 = vadd.f32 0.0, %v584
        %v586 = vpop.f32.mrb[0].mxu0
        %587 = vmatprep.mubr.f32.mxu0 0.0
        %588 = vmatmul.mubr.f32.gmra.mrb[0].mxu0 %v338
        %v589 = vpop.f32.mrb[0].mxu0
        %v590 = vadd.f32 0.0, %v589
        %v591 = vpop.f32.mrb[0].mxu0
        %592 = vmatprep.mubr.f32.mxu0 0.0
        %593 = vmatmul.mubr.f32.gmra.mrb[0].mxu0 %v341
        %v594 = vpop.f32.mrb[0].mxu0
        %v595 = vadd.f32 0.0, %v594
        %v596 = vpop.f32.mrb[0].mxu0
        %597 = vmatprep.mubr.f32.mxu0 0.0
        %598 = vmatmul.mubr.f32.gmra.mrb[0].mxu0 %v344
        %v599 = vpop.f32.mrb[0].mxu0
        %v600 = vadd.f32 0.0, %v599
        %v601 = vpop.f32.mrb[0].mxu0
        %602 = vmatprep.mubr.f32.mxu0 0.0
        %603 = vmatmul.mubr.f32.gmra.mrb[0].mxu0 %v347
        %v604 = vpop.f32.mrb[0].mxu0
        %v605 = vadd.f32 0.0, %v604
        %v606 = vpop.f32.mrb[0].mxu0
        %607 = vmatprep.mubr.f32.mxu0 0.0
        %608 = vmatmul.mubr.f32.gmra.mrb[0].mxu0 %v350
        %v609 = vpop.f32.mrb[0].mxu0
        %v610 = vadd.f32 0.0, %v609
        %v611 = vpop.f32.mrb[0].mxu0
        %612 = vmatprep.mubr.f32.mxu0 0.0
        %613 = vmatmul.mubr.f32.gmra.mrb[0].mxu0 %v353
        %v614 = vpop.f32.mrb[0].mxu0
        %v615 = vadd.f32 0.0, %v614
        %v616 = vpop.f32.mrb[0].mxu0
        %617 = vmatprep.mubr.f32.mxu0 0.0
        %618 = vmatmul.mubr.f32.gmra.mrb[0].mxu0 %v356
        %v619 = vpop.f32.mrb[0].mxu0
        %v620 = vadd.f32 0.0, %v619
        %v621 = vpop.f32.mrb[0].mxu0
        %622 = vmatprep.mubr.f32.mxu0 0.0
        %623 = vmatmul.mubr.f32.gmra.mrb[0].mxu0 %v359
        %v624 = vpop.f32.mrb[0].mxu0
        %v625 = vadd.f32 0.0, %v624
        %v626 = vpop.f32.mrb[0].mxu0
        %627 = vmatprep.mubr.f32.mxu0 0.0
        %628 = vmatmul.mubr.f32.gmra.mrb[0].mxu0 %v362
        %v629 = vpop.f32.mrb[0].mxu0
        %v630 = vadd.f32 0.0, %v629
        %v631 = vpop.f32.mrb[0].mxu0
        %632 = vmatprep.mubr.f32.mxu0 0.0
        %633 = vmatmul.mubr.f32.gmra.mrb[0].mxu0 %v365
        %v634 = vpop.f32.mrb[0].mxu0
        %v635 = vadd.f32 0.0, %v634
        %v636 = vpop.f32.mrb[0].mxu0
        %637 = vmatprep.mubr.f32.mxu0 0.0
        %638 = vmatmul.mubr.f32.gmra.mrb[0].mxu0 %v368
        %v639 = vpop.f32.mrb[0].mxu0
        %v640 = vadd.f32 0.0, %v639
        %v641 = vpop.f32.mrb[0].mxu0
        %642 = vmatprep.mubr.f32.mxu0 0.0
        %643 = vmatmul.mubr.f32.gmra.mrb[0].mxu0 %v371
        %v644 = vpop.f32.mrb[0].mxu0
        %v645 = vadd.f32 0.0, %v644
        %v646 = vpop.f32.mrb[0].mxu0
        %647 = vmatprep.mubr.f32.mxu0 0.0
        %648 = vmatmul.mubr.f32.gmra.mrb[0].mxu0 %v374
        %v649 = vpop.f32.mrb[0].mxu0
        %v650 = vadd.f32 0.0, %v649
        %v651 = vpop.f32.mrb[0].mxu0
        %652 = vmatprep.mubr.f32.mxu0 0.0
        %653 = vmatmul.mubr.f32.gmra.mrb[0].mxu0 %v377
        %v654 = vpop.f32.mrb[0].mxu0
        %v655 = vadd.f32 0.0, %v654
        %v656 = vpop.f32.mrb[0].mxu0
        %657 = vmatprep.mubr.f32.mxu0 0.0
        %658 = vmatmul.mubr.f32.gmra.mrb[0].mxu0 %v380
        %v659 = vpop.f32.mrb[0].mxu0
        %v660 = vadd.f32 0.0, %v659
        %v661 = vpop.f32.mrb[0].mxu0
        %662 = vmatprep.mubr.f32.mxu0 0.0
        %663 = vmatmul.mubr.f32.gmra.mrb[0].mxu0 %v383
        %v664 = vpop.f32.mrb[0].mxu0
        %v665 = vadd.f32 0.0, %v664
        %v666 = vpop.f32.mrb[0].mxu0
        %667 = vmatprep.mubr.f32.mxu0 0.0
        %668 = vmatmul.mubr.f32.gmra.mrb[0].mxu0 %v386
        %v669 = vpop.f32.mrb[0].mxu0
        %v670 = vadd.f32 0.0, %v669
        %v671 = vpop.f32.mrb[0].mxu0
        %672 = vmatprep.mubr.f32.mxu0 0.0
        %673 = vmatmul.mubr.f32.gmra.mrb[0].mxu0 %v389
        %v674 = vpop.f32.mrb[0].mxu0
        %v675 = vadd.f32 0.0, %v674
        %v676 = vpop.f32.mrb[0].mxu0
        %677 = vmatprep.mubr.f32.mxu0 0.0
        %678 = vmatmul.mubr.f32.gmra.mrb[0].mxu0 %v392
        %v679 = vpop.f32.mrb[0].mxu0
        %v680 = vadd.f32 0.0, %v679
        %v681 = vpop.f32.mrb[0].mxu0
        %682 = vmatprep.mubr.f32.mxu0 0.0
        %683 = vmatmul.mubr.f32.gmra.mrb[0].mxu0 %v395
        %v684 = vpop.f32.mrb[0].mxu0
        %v685 = vadd.f32 0.0, %v684
        %v686 = vpop.f32.mrb[0].mxu0
        %687 = vmatprep.mubr.f32.mxu0 0.0
        %688 = vmatmul.mubr.f32.gmra.mrb[0].mxu0 %v398
        %v689 = vpop.f32.mrb[0].mxu0
        %v690 = vadd.f32 0.0, %v689
        %v691 = vpop.f32.mrb[0].mxu0
        %692 = vmatprep.mubr.f32.mxu0 0.0
        %693 = vmatmul.mubr.f32.gmra.mrb[0].mxu0 %v401
        %v694 = vpop.f32.mrb[0].mxu0
        %v695 = vadd.f32 0.0, %v694
        %v696 = vpop.f32.mrb[0].mxu0
        %697 = vmatprep.mubr.f32.mxu0 0.0
        %698 = vmatmul.mubr.f32.gmra.mrb[0].mxu0 %v404
        %v699 = vpop.f32.mrb[0].mxu0
        %v700 = vadd.f32 0.0, %v699
        %v701 = vpop.f32.mrb[0].mxu0
        %702 = vmatprep.mubr.f32.mxu0 0.0
        %703 = vmatmul.mubr.f32.gmra.mrb[0].mxu0 %v407
        %v704 = vpop.f32.mrb[0].mxu0
        %v705 = vadd.f32 0.0, %v704
        %v706 = vpop.f32.mrb[0].mxu0
        %707 = vmatprep.mubr.f32.mxu0 0.0
        %708 = vmatmul.mubr.f32.gmra.mrb[0].mxu0 %v410
        %v709 = vpop.f32.mrb[0].mxu0
        %v710 = vadd.f32 0.0, %v709
        %v711 = vpop.f32.mrb[0].mxu0
        %712 = vmatprep.mubr.f32.mxu0 0.0
        %713 = vmatmul.mubr.f32.gmra.mrb[0].mxu0 %v413
        %v714 = vpop.f32.mrb[0].mxu0
        %v715 = vadd.f32 0.0, %v714
        %v716 = vpop.f32.mrb[0].mxu0
        %717 = vmatprep.mubr.f32.mxu0 0.0
        %718 = vmatmul.mubr.f32.gmra.mrb[0].mxu0 %v416
        %v719 = vpop.f32.mrb[0].mxu0
        %v720 = vadd.f32 0.0, %v719
        %v721 = vpop.f32.mrb[0].mxu0
        %722 = vmatprep.mubr.f32.mxu0 0.0
        %723 = vmatmul.mubr.f32.gmra.mrb[0].mxu0 %v419
        %v724 = vpop.f32.mrb[0].mxu0
        %v725 = vadd.f32 0.0, %v724
        %v726 = vpop.f32.mrb[0].mxu0
        %727 = vmatprep.mubr.f32.mxu0 0.0
        %728 = vmatmul.mubr.f32.gmra.mrb[0].mxu0 %v422
        %v729 = vpop.f32.mrb[0].mxu0
        %v730 = vadd.f32 0.0, %v729
        %v731 = vpop.f32.mrb[0].mxu0
        %732 = vdwg.mxu0
        %v734 = vsel %vm279, %v223, 0
        %v737 = vsel %vm279, %v224, 0
        %v740 = vsel %vm279, %v225, 0
        %v743 = vsel %vm424, %v272, 0
        %745 = vmatprep.subr.mxu0 0.0
        %746 = vmatpush1.msra.mxu0 %v271
        %747 = vmatprep.subr.mxu0 0.0
        %748 = vmatpush1.msra.mxu0 %v743
        %749 = vmatprep.subr.mxu0 0.0
        %750 = vmatpush1.msra.mxu0 0.0
        %751 = vmatprep.subr.mxu0 0.0
        %752 = vmatpush1.msra.mxu0 0.0
        %753 = vmatprep.subr.mxu0 0.0
        %754 = vmatpush1.msra.mxu0 0.0
        %755 = vmatprep.subr.mxu0 0.0
        %756 = vmatpush1.msra.mxu0 0.0
        %757 = vmatprep.subr.mxu0 0.0
        %758 = vmatpush1.msra.mxu0 0.0
        %759 = vmatprep.subr.mxu0 0.0
        %760 = vmatpush1.msra.mxu0 0.0
        %761 = vmatprep.subr.mxu0 0.0
        %762 = vmatpush1.msra.mxu0 0.0
        %763 = vmatprep.subr.mxu0 0.0
        %764 = vmatpush1.msra.mxu0 0.0
        %765 = vmatprep.subr.mxu0 0.0
        %766 = vmatpush1.msra.mxu0 0.0
        %767 = vmatprep.subr.mxu0 0.0
        %768 = vmatpush1.msra.mxu0 0.0
        %769 = vmatprep.subr.mxu0 0.0
        %770 = vmatpush1.msra.mxu0 0.0
        %771 = vmatprep.subr.mxu0 0.0
        %772 = vmatpush1.msra.mxu0 0.0
        %773 = vmatprep.subr.mxu0 0.0
        %774 = vmatpush1.msra.mxu0 0.0
        %775 = vmatprep.subr.mxu0 0.0
        %776 = vmatpush1.msra.mxu0 0.0
        %777 = vmatprep.subr.mxu0 0.0
        %778 = vmatpush1.msra.mxu0 0.0
        %779 = vmatprep.subr.mxu0 0.0
        %780 = vmatpush1.msra.mxu0 0.0
        %781 = vmatprep.subr.mxu0 0.0
        %782 = vmatpush1.msra.mxu0 0.0
        %783 = vmatprep.subr.mxu0 0.0
        %784 = vmatpush1.msra.mxu0 0.0
        %785 = vmatprep.subr.mxu0 0.0
        %786 = vmatpush1.msra.mxu0 0.0
        %787 = vmatprep.subr.mxu0 0.0
        %788 = vmatpush1.msra.mxu0 0.0
        %789 = vmatprep.subr.mxu0 0.0
        %790 = vmatpush1.msra.mxu0 0.0
        %791 = vmatprep.subr.mxu0 0.0
        %792 = vmatpush1.msra.mxu0 0.0
        %793 = vmatprep.subr.mxu0 0.0
        %794 = vmatpush1.msra.mxu0 0.0
        %795 = vmatprep.subr.mxu0 0.0
        %796 = vmatpush1.msra.mxu0 0.0
        %797 = vmatprep.subr.mxu0 0.0
        %798 = vmatpush1.msra.mxu0 0.0
        %799 = vmatprep.subr.mxu0 0.0
        %800 = vmatpush1.msra.mxu0 0.0
        %801 = vmatprep.subr.mxu0 0.0
        %802 = vmatpush1.msra.mxu0 0.0
        %803 = vmatprep.subr.mxu0 0.0
        %804 = vmatpush1.msra.mxu0 0.0
        %805 = vmatprep.subr.mxu0 0.0
        %806 = vmatpush1.msra.mxu0 0.0
        %807 = vmatprep.subr.mxu0 0.0
        %808 = vmatpush1.msra.mxu0 0.0
        %809 = vmatprep.mubr.f32.mxu0 0.0
        %810 = vmatmul.mubr.f32.gmra.mrb[0].mxu0 %v734
        %v811 = vpop.f32.mrb[0].mxu0
        %v812 = vadd.f32 %v495, %v811
        %v813 = vpop.f32.mrb[0].mxu0
        %814 = vmatprep.mubr.f32.mxu0 0.0
        %815 = vmatmul.mubr.f32.gmra.mrb[0].mxu0 %v737
        %v816 = vpop.f32.mrb[0].mxu0
        %v817 = vadd.f32 %v500, %v816
        %v818 = vpop.f32.mrb[0].mxu0
        %819 = vmatprep.mubr.f32.mxu0 0.0
        %820 = vmatmul.mubr.f32.gmra.mrb[0].mxu0 %v740
        %v821 = vpop.f32.mrb[0].mxu0
        %v822 = vadd.f32 %v505, %v821
        %v823 = vpop.f32.mrb[0].mxu0
        %824 = vmatprep.mubr.f32.mxu0 0.0
        %825 = vmatmul.mubr.f32.gmra.mrb[0].mxu0 %v281
        %v826 = vpop.f32.mrb[0].mxu0
        %v827 = vadd.f32 %v510, %v826
        %v828 = vpop.f32.mrb[0].mxu0
        %829 = vmatprep.mubr.f32.mxu0 0.0
        %830 = vmatmul.mubr.f32.gmra.mrb[0].mxu0 %v284
        %v831 = vpop.f32.mrb[0].mxu0
        %v832 = vadd.f32 %v515, %v831
        %v833 = vpop.f32.mrb[0].mxu0
        %834 = vmatprep.mubr.f32.mxu0 0.0
        %835 = vmatmul.mubr.f32.gmra.mrb[0].mxu0 %v287
        %v836 = vpop.f32.mrb[0].mxu0
        %v837 = vadd.f32 %v520, %v836
        %v838 = vpop.f32.mrb[0].mxu0
        %839 = vmatprep.mubr.f32.mxu0 0.0
        %840 = vmatmul.mubr.f32.gmra.mrb[0].mxu0 %v290
        %v841 = vpop.f32.mrb[0].mxu0
        %v842 = vadd.f32 %v525, %v841
        %v843 = vpop.f32.mrb[0].mxu0
        %844 = vmatprep.mubr.f32.mxu0 0.0
        %845 = vmatmul.mubr.f32.gmra.mrb[0].mxu0 %v293
        %v846 = vpop.f32.mrb[0].mxu0
        %v847 = vadd.f32 %v530, %v846
        %v848 = vpop.f32.mrb[0].mxu0
        %849 = vmatprep.mubr.f32.mxu0 0.0
        %850 = vmatmul.mubr.f32.gmra.mrb[0].mxu0 %v296
        %v851 = vpop.f32.mrb[0].mxu0
        %v852 = vadd.f32 %v535, %v851
        %v853 = vpop.f32.mrb[0].mxu0
        %854 = vmatprep.mubr.f32.mxu0 0.0
        %855 = vmatmul.mubr.f32.gmra.mrb[0].mxu0 %v299
        %v856 = vpop.f32.mrb[0].mxu0
        %v857 = vadd.f32 %v540, %v856
        %v858 = vpop.f32.mrb[0].mxu0
        %859 = vmatprep.mubr.f32.mxu0 0.0
        %860 = vmatmul.mubr.f32.gmra.mrb[0].mxu0 %v302
        %v861 = vpop.f32.mrb[0].mxu0
        %v862 = vadd.f32 %v545, %v861
        %v863 = vpop.f32.mrb[0].mxu0
        %864 = vmatprep.mubr.f32.mxu0 0.0
        %865 = vmatmul.mubr.f32.gmra.mrb[0].mxu0 %v305
        %v866 = vpop.f32.mrb[0].mxu0
        %v867 = vadd.f32 %v550, %v866
        %v868 = vpop.f32.mrb[0].mxu0
        %869 = vmatprep.mubr.f32.mxu0 0.0
        %870 = vmatmul.mubr.f32.gmra.mrb[0].mxu0 %v308
        %v871 = vpop.f32.mrb[0].mxu0
        %v872 = vadd.f32 %v555, %v871
        %v873 = vpop.f32.mrb[0].mxu0
        %874 = vmatprep.mubr.f32.mxu0 0.0
        %875 = vmatmul.mubr.f32.gmra.mrb[0].mxu0 %v311
        %v876 = vpop.f32.mrb[0].mxu0
        %v877 = vadd.f32 %v560, %v876
        %v878 = vpop.f32.mrb[0].mxu0
        %879 = vmatprep.mubr.f32.mxu0 0.0
        %880 = vmatmul.mubr.f32.gmra.mrb[0].mxu0 %v314
        %v881 = vpop.f32.mrb[0].mxu0
        %v882 = vadd.f32 %v565, %v881
        %v883 = vpop.f32.mrb[0].mxu0
        %884 = vmatprep.mubr.f32.mxu0 0.0
        %885 = vmatmul.mubr.f32.gmra.mrb[0].mxu0 %v317
        %v886 = vpop.f32.mrb[0].mxu0
        %v887 = vadd.f32 %v570, %v886
        %v888 = vpop.f32.mrb[0].mxu0
        %889 = vmatprep.mubr.f32.mxu0 0.0
        %890 = vmatmul.mubr.f32.gmra.mrb[0].mxu0 %v320
        %v891 = vpop.f32.mrb[0].mxu0
        %v892 = vadd.f32 %v575, %v891
        %v893 = vpop.f32.mrb[0].mxu0
        %894 = vmatprep.mubr.f32.mxu0 0.0
        %895 = vmatmul.mubr.f32.gmra.mrb[0].mxu0 %v323
        %v896 = vpop.f32.mrb[0].mxu0
        %v897 = vadd.f32 %v580, %v896
        %v898 = vpop.f32.mrb[0].mxu0
        %899 = vmatprep.mubr.f32.mxu0 0.0
        %900 = vmatmul.mubr.f32.gmra.mrb[0].mxu0 %v326
        %v901 = vpop.f32.mrb[0].mxu0
        %v902 = vadd.f32 %v585, %v901
        %v903 = vpop.f32.mrb[0].mxu0
        %904 = vmatprep.mubr.f32.mxu0 0.0
        %905 = vmatmul.mubr.f32.gmra.mrb[0].mxu0 %v329
        %v906 = vpop.f32.mrb[0].mxu0
        %v907 = vadd.f32 %v590, %v906
        %v908 = vpop.f32.mrb[0].mxu0
        %909 = vmatprep.mubr.f32.mxu0 0.0
        %910 = vmatmul.mubr.f32.gmra.mrb[0].mxu0 %v332
        %v911 = vpop.f32.mrb[0].mxu0
        %v912 = vadd.f32 %v595, %v911
        %v913 = vpop.f32.mrb[0].mxu0
        %914 = vmatprep.mubr.f32.mxu0 0.0
        %915 = vmatmul.mubr.f32.gmra.mrb[0].mxu0 %v335
        %v916 = vpop.f32.mrb[0].mxu0
        %v917 = vadd.f32 %v600, %v916
        %v918 = vpop.f32.mrb[0].mxu0
        %919 = vmatprep.mubr.f32.mxu0 0.0
        %920 = vmatmul.mubr.f32.gmra.mrb[0].mxu0 %v338
        %v921 = vpop.f32.mrb[0].mxu0
        %v922 = vadd.f32 %v605, %v921
        %v923 = vpop.f32.mrb[0].mxu0
        %924 = vmatprep.mubr.f32.mxu0 0.0
        %925 = vmatmul.mubr.f32.gmra.mrb[0].mxu0 %v341
        %v926 = vpop.f32.mrb[0].mxu0
        %v927 = vadd.f32 %v610, %v926
        %v928 = vpop.f32.mrb[0].mxu0
        %929 = vmatprep.mubr.f32.mxu0 0.0
        %930 = vmatmul.mubr.f32.gmra.mrb[0].mxu0 %v344
        %v931 = vpop.f32.mrb[0].mxu0
        %v932 = vadd.f32 %v615, %v931
        %v933 = vpop.f32.mrb[0].mxu0
        %934 = vmatprep.mubr.f32.mxu0 0.0
        %935 = vmatmul.mubr.f32.gmra.mrb[0].mxu0 %v347
        %v936 = vpop.f32.mrb[0].mxu0
        %v937 = vadd.f32 %v620, %v936
        %v938 = vpop.f32.mrb[0].mxu0
        %939 = vmatprep.mubr.f32.mxu0 0.0
        %940 = vmatmul.mubr.f32.gmra.mrb[0].mxu0 %v350
        %v941 = vpop.f32.mrb[0].mxu0
        %v942 = vadd.f32 %v625, %v941
        %v943 = vpop.f32.mrb[0].mxu0
        %944 = vmatprep.mubr.f32.mxu0 0.0
        %945 = vmatmul.mubr.f32.gmra.mrb[0].mxu0 %v353
        %v946 = vpop.f32.mrb[0].mxu0
        %v947 = vadd.f32 %v630, %v946
        %v948 = vpop.f32.mrb[0].mxu0
        %949 = vmatprep.mubr.f32.mxu0 0.0
        %950 = vmatmul.mubr.f32.gmra.mrb[0].mxu0 %v356
        %v951 = vpop.f32.mrb[0].mxu0
        %v952 = vadd.f32 %v635, %v951
        %v953 = vpop.f32.mrb[0].mxu0
        %954 = vmatprep.mubr.f32.mxu0 0.0
        %955 = vmatmul.mubr.f32.gmra.mrb[0].mxu0 %v359
        %v956 = vpop.f32.mrb[0].mxu0
        %v957 = vadd.f32 %v640, %v956
        %v958 = vpop.f32.mrb[0].mxu0
        %959 = vmatprep.mubr.f32.mxu0 0.0
        %960 = vmatmul.mubr.f32.gmra.mrb[0].mxu0 %v362
        %v961 = vpop.f32.mrb[0].mxu0
        %v962 = vadd.f32 %v645, %v961
        %v963 = vpop.f32.mrb[0].mxu0
        %964 = vmatprep.mubr.f32.mxu0 0.0
        %965 = vmatmul.mubr.f32.gmra.mrb[0].mxu0 %v365
        %v966 = vpop.f32.mrb[0].mxu0
        %v967 = vadd.f32 %v650, %v966
        %v968 = vpop.f32.mrb[0].mxu0
        %969 = vmatprep.mubr.f32.mxu0 0.0
        %970 = vmatmul.mubr.f32.gmra.mrb[0].mxu0 %v368
        %v971 = vpop.f32.mrb[0].mxu0
        %v972 = vadd.f32 %v655, %v971
        %v973 = vpop.f32.mrb[0].mxu0
        %974 = vmatprep.mubr.f32.mxu0 0.0
        %975 = vmatmul.mubr.f32.gmra.mrb[0].mxu0 %v371
        %v976 = vpop.f32.mrb[0].mxu0
        %v977 = vadd.f32 %v660, %v976
        %v978 = vpop.f32.mrb[0].mxu0
        %979 = vmatprep.mubr.f32.mxu0 0.0
        %980 = vmatmul.mubr.f32.gmra.mrb[0].mxu0 %v374
        %v981 = vpop.f32.mrb[0].mxu0
        %v982 = vadd.f32 %v665, %v981
        %v983 = vpop.f32.mrb[0].mxu0
        %984 = vmatprep.mubr.f32.mxu0 0.0
        %985 = vmatmul.mubr.f32.gmra.mrb[0].mxu0 %v377
        %v986 = vpop.f32.mrb[0].mxu0
        %v987 = vadd.f32 %v670, %v986
        %v988 = vpop.f32.mrb[0].mxu0
        %989 = vmatprep.mubr.f32.mxu0 0.0
        %990 = vmatmul.mubr.f32.gmra.mrb[0].mxu0 %v380
        %v991 = vpop.f32.mrb[0].mxu0
        %v992 = vadd.f32 %v675, %v991
        %v993 = vpop.f32.mrb[0].mxu0
        %994 = vmatprep.mubr.f32.mxu0 0.0
        %995 = vmatmul.mubr.f32.gmra.mrb[0].mxu0 %v383
        %v996 = vpop.f32.mrb[0].mxu0
        %v997 = vadd.f32 %v680, %v996
        %v998 = vpop.f32.mrb[0].mxu0
        %999 = vmatprep.mubr.f32.mxu0 0.0
        %1000 = vmatmul.mubr.f32.gmra.mrb[0].mxu0 %v386
        %v1001 = vpop.f32.mrb[0].mxu0
        %v1002 = vadd.f32 %v685, %v1001
        %v1003 = vpop.f32.mrb[0].mxu0
        %1004 = vmatprep.mubr.f32.mxu0 0.0
        %1005 = vmatmul.mubr.f32.gmra.mrb[0].mxu0 %v389
        %v1006 = vpop.f32.mrb[0].mxu0
        %v1007 = vadd.f32 %v690, %v1006
        %v1008 = vpop.f32.mrb[0].mxu0
        %1009 = vmatprep.mubr.f32.mxu0 0.0
        %1010 = vmatmul.mubr.f32.gmra.mrb[0].mxu0 %v392
        %v1011 = vpop.f32.mrb[0].mxu0
        %v1012 = vadd.f32 %v695, %v1011
        %v1013 = vpop.f32.mrb[0].mxu0
        %1014 = vmatprep.mubr.f32.mxu0 0.0
        %1015 = vmatmul.mubr.f32.gmra.mrb[0].mxu0 %v395
        %v1016 = vpop.f32.mrb[0].mxu0
        %v1017 = vadd.f32 %v700, %v1016
        %v1018 = vpop.f32.mrb[0].mxu0
        %1019 = vmatprep.mubr.f32.mxu0 0.0
        %1020 = vmatmul.mubr.f32.gmra.mrb[0].mxu0 %v398
        %v1021 = vpop.f32.mrb[0].mxu0
        %v1022 = vadd.f32 %v705, %v1021
        %v1023 = vpop.f32.mrb[0].mxu0
        %1024 = vmatprep.mubr.f32.mxu0 0.0
        %1025 = vmatmul.mubr.f32.gmra.mrb[0].mxu0 %v401
        %v1026 = vpop.f32.mrb[0].mxu0
        %v1027 = vadd.f32 %v710, %v1026
        %v1028 = vpop.f32.mrb[0].mxu0
        %1029 = vmatprep.mubr.f32.mxu0 0.0
        %1030 = vmatmul.mubr.f32.gmra.mrb[0].mxu0 %v404
        %v1031 = vpop.f32.mrb[0].mxu0
        %v1032 = vadd.f32 %v715, %v1031
        %v1033 = vpop.f32.mrb[0].mxu0
        %1034 = vmatprep.mubr.f32.mxu0 0.0
        %1035 = vmatmul.mubr.f32.gmra.mrb[0].mxu0 %v407
        %v1036 = vpop.f32.mrb[0].mxu0
        %v1037 = vadd.f32 %v720, %v1036
        %v1038 = vpop.f32.mrb[0].mxu0
        %1039 = vmatprep.mubr.f32.mxu0 0.0
        %1040 = vmatmul.mubr.f32.gmra.mrb[0].mxu0 %v410
        %v1041 = vpop.f32.mrb[0].mxu0
        %v1042 = vadd.f32 %v725, %v1041
        %v1043 = vpop.f32.mrb[0].mxu0
        %1044 = vmatprep.mubr.f32.mxu0 0.0
        %1045 = vmatmul.mubr.f32.gmra.mrb[0].mxu0 %v413
        %v1046 = vpop.f32.mrb[0].mxu0
        %v1047 = vadd.f32 %v730, %v1046
        %v1048 = vpop.f32.mrb[0].mxu0
        %1049 = vdwg.mxu0
        %v1050 = vld [vmem:[%s222 + $0x30] sm:$0xff]
        %v1051 = vld [vmem:[%s222 + $0x38] sm:$0xff]
        %v1052 = vld [vmem:[%s222 + $0x40] sm:$0xff]
        %v1053 = vld [vmem:[%s222 + $0x48] sm:$0xff]
        %v1054 = vld [vmem:[%s222 + $0x50] sm:$0xff]
        %v1055 = vld [vmem:[%s222 + $0x58] sm:$0xff]
        %v1056 = vld [vmem:[%s222 + $0x60] sm:$0xff]
        %v1057 = vld [vmem:[%s222 + $0x68] sm:$0xff]
        %v1058 = vld [vmem:[%s222 + $0x70] sm:$0xff]
        %v1059 = vld [vmem:[%s222 + $0x78] sm:$0xff]
        %v1060 = vld [vmem:[%s222 + $0x80] sm:$0xff]
        %v1061 = vld [vmem:[%s222 + $0x88] sm:$0xff]
        %v1062 = vld [vmem:[%s222 + $0x90] sm:$0xff]
        %v1063 = vld [vmem:[%s222 + $0x98] sm:$0xff]
        %v1064 = vld [vmem:[%s222 + $0xa0] sm:$0xff]
        %v1065 = vld [vmem:[%s222 + $0xa8] sm:$0xff]
        %v1066 = vld [vmem:[%s222 + $0xb0] sm:$0xff]
        %v1067 = vld [vmem:[%s222 + $0xb8] sm:$0xff]
        %v1068 = vld [vmem:[%s222 + $0xc0] sm:$0xff]
        %v1069 = vld [vmem:[%s222 + $0xc8] sm:$0xff]
        %v1070 = vld [vmem:[%s222 + $0xd0] sm:$0xff]
        %v1071 = vld [vmem:[%s222 + $0xd8] sm:$0xff]
        %v1072 = vld [vmem:[%s222 + $0xe0] sm:$0xff]
        %v1073 = vld [vmem:[%s222 + $0xe8] sm:$0xff]
        %v1074 = vld [vmem:[%s222 + $0xf0] sm:$0xff]
        %v1075 = vld [vmem:[%s222 + $0xf8] sm:$0xff]
        %v1076 = vld [vmem:[%s222 + $0x100] sm:$0xff]
        %v1077 = vld [vmem:[%s222 + $0x108] sm:$0xff]
        %v1078 = vld [vmem:[%s222 + $0x110] sm:$0xff]
        %v1079 = vld [vmem:[%s222 + $0x118] sm:$0xff]
        %v1080 = vld [vmem:[%s222 + $0x120] sm:$0xff]
        %v1081 = vld [vmem:[%s222 + $0x128] sm:$0xff]
        %v1082 = vld [vmem:[%s222 + $0x130] sm:$0xff]
        %v1083 = vld [vmem:[%s222 + $0x138] sm:$0xff]
        %v1084 = vld [vmem:[%s222 + $0x140] sm:$0xff]
        %v1085 = vld [vmem:[%s222 + $0x148] sm:$0xff]
        %v1086 = vld [vmem:[%s222 + $0x150] sm:$0xff]
        %v1087 = vld [vmem:[%s222 + $0x158] sm:$0xff]
        %v1088 = vld [vmem:[%s222 + $0x160] sm:$0xff]
        %v1089 = vld [vmem:[%s222 + $0x168] sm:$0xff]
        %v1090 = vld [vmem:[%s222 + $0x170] sm:$0xff]
        %v1091 = vld [vmem:[%s222 + $0x178] sm:$0xff]
        %v1092 = vld [vmem:[%s222 + $0x180] sm:$0xff]
        %v1093 = vld [vmem:[%s222 + $0x188] sm:$0xff]
        %v1094 = vld [vmem:[%s222 + $0x190] sm:$0xff]
        %v1095 = vld [vmem:[%s222 + $0x198] sm:$0xff]
        %v1096 = vld [vmem:[%s222 + $0x1a0] sm:$0xff]
        %v1097 = vld [vmem:[%s222 + $0x1a8] sm:$0xff]
        %s1098 = scalar_lea.vmem %s1, 32
        %v1099 = vld [vmem:[%s1098] sm:$0xff]
        %v1100 = vld [vmem:[%s1098 + $0x8] sm:$0xf]
        %v1102 = vsel %vm279, %v1050, 0
        %v1105 = vsel %vm279, %v1051, 0
        %v1108 = vsel %vm279, %v1052, 0
        %v1111 = vsel %vm279, %v1053, 0
        %v1114 = vsel %vm279, %v1054, 0
        %v1117 = vsel %vm279, %v1055, 0
        %v1120 = vsel %vm279, %v1056, 0
        %v1123 = vsel %vm279, %v1057, 0
        %v1126 = vsel %vm279, %v1058, 0
        %v1129 = vsel %vm279, %v1059, 0
        %v1132 = vsel %vm279, %v1060, 0
        %v1135 = vsel %vm279, %v1061, 0
        %v1138 = vsel %vm279, %v1062, 0
        %v1141 = vsel %vm279, %v1063, 0
        %v1144 = vsel %vm279, %v1064, 0
        %v1147 = vsel %vm279, %v1065, 0
        %v1150 = vsel %vm279, %v1066, 0
        %v1153 = vsel %vm279, %v1067, 0
        %v1156 = vsel %vm279, %v1068, 0
        %v1159 = vsel %vm279, %v1069, 0
        %v1162 = vsel %vm279, %v1070, 0
        %v1165 = vsel %vm279, %v1071, 0
        %v1168 = vsel %vm279, %v1072, 0
        %v1171 = vsel %vm279, %v1073, 0
        %v1174 = vsel %vm279, %v1074, 0
        %v1177 = vsel %vm279, %v1075, 0
        %v1180 = vsel %vm279, %v1076, 0
        %v1183 = vsel %vm279, %v1077, 0
        %v1186 = vsel %vm279, %v1078, 0
        %v1189 = vsel %vm279, %v1079, 0
        %v1192 = vsel %vm279, %v1080, 0
        %v1195 = vsel %vm279, %v1081, 0
        %v1198 = vsel %vm279, %v1082, 0
        %v1201 = vsel %vm279, %v1083, 0
        %v1204 = vsel %vm279, %v1084, 0
        %v1207 = vsel %vm279, %v1085, 0
        %v1210 = vsel %vm279, %v1086, 0
        %v1213 = vsel %vm279, %v1087, 0
        %v1216 = vsel %vm279, %v1088, 0
        %v1219 = vsel %vm279, %v1089, 0
        %v1222 = vsel %vm279, %v1090, 0
        %v1225 = vsel %vm279, %v1091, 0
        %v1228 = vsel %vm279, %v1092, 0
        %v1231 = vsel %vm279, %v1093, 0
        %v1234 = vsel %vm279, %v1094, 0
        %v1237 = vsel %vm279, %v1095, 0
        %v1240 = vsel %vm279, %v1096, 0
        %v1243 = vsel %vm279, %v1097, 0
        %v1246 = vsel %vm424, %v1100, 0
        %1248 = vmatprep.subr.mxu0 0.0
        %1249 = vmatpush1.msra.mxu0 %v1099
        %1250 = vmatprep.subr.mxu0 0.0
        %1251 = vmatpush1.msra.mxu0 %v1246
        %1252 = vmatprep.subr.mxu0 0.0
        %1253 = vmatpush1.msra.mxu0 0.0
        %1254 = vmatprep.subr.mxu0 0.0
        %1255 = vmatpush1.msra.mxu0 0.0
        %1256 = vmatprep.subr.mxu0 0.0
        %1257 = vmatpush1.msra.mxu0 0.0
        %1258 = vmatprep.subr.mxu0 0.0
        %1259 = vmatpush1.msra.mxu0 0.0
        %1260 = vmatprep.subr.mxu0 0.0
        %1261 = vmatpush1.msra.mxu0 0.0
        %1262 = vmatprep.subr.mxu0 0.0
        %1263 = vmatpush1.msra.mxu0 0.0
        %1264 = vmatprep.subr.mxu0 0.0
        %1265 = vmatpush1.msra.mxu0 0.0
        %1266 = vmatprep.subr.mxu0 0.0
        %1267 = vmatpush1.msra.mxu0 0.0
        %1268 = vmatprep.subr.mxu0 0.0
        %1269 = vmatpush1.msra.mxu0 0.0
        %1270 = vmatprep.subr.mxu0 0.0
        %1271 = vmatpush1.msra.mxu0 0.0
        %1272 = vmatprep.subr.mxu0 0.0
        %1273 = vmatpush1.msra.mxu0 0.0
        %1274 = vmatprep.subr.mxu0 0.0
        %1275 = vmatpush1.msra.mxu0 0.0
        %1276 = vmatprep.subr.mxu0 0.0
        %1277 = vmatpush1.msra.mxu0 0.0
        %1278 = vmatprep.subr.mxu0 0.0
        %1279 = vmatpush1.msra.mxu0 0.0
        %1280 = vmatprep.subr.mxu0 0.0
        %1281 = vmatpush1.msra.mxu0 0.0
        %1282 = vmatprep.subr.mxu0 0.0
        %1283 = vmatpush1.msra.mxu0 0.0
        %1284 = vmatprep.subr.mxu0 0.0
        %1285 = vmatpush1.msra.mxu0 0.0
        %1286 = vmatprep.subr.mxu0 0.0
        %1287 = vmatpush1.msra.mxu0 0.0
        %1288 = vmatprep.subr.mxu0 0.0
        %1289 = vmatpush1.msra.mxu0 0.0
        %1290 = vmatprep.subr.mxu0 0.0
        %1291 = vmatpush1.msra.mxu0 0.0
        %1292 = vmatprep.subr.mxu0 0.0
        %1293 = vmatpush1.msra.mxu0 0.0
        %1294 = vmatprep.subr.mxu0 0.0
        %1295 = vmatpush1.msra.mxu0 0.0
        %1296 = vmatprep.subr.mxu0 0.0
        %1297 = vmatpush1.msra.mxu0 0.0
        %1298 = vmatprep.subr.mxu0 0.0
        %1299 = vmatpush1.msra.mxu0 0.0
        %1300 = vmatprep.subr.mxu0 0.0
        %1301 = vmatpush1.msra.mxu0 0.0
        %1302 = vmatprep.subr.mxu0 0.0
        %1303 = vmatpush1.msra.mxu0 0.0
        %1304 = vmatprep.subr.mxu0 0.0
        %1305 = vmatpush1.msra.mxu0 0.0
        %1306 = vmatprep.subr.mxu0 0.0
        %1307 = vmatpush1.msra.mxu0 0.0
        %1308 = vmatprep.subr.mxu0 0.0
        %1309 = vmatpush1.msra.mxu0 0.0
        %1310 = vmatprep.subr.mxu0 0.0
        %1311 = vmatpush1.msra.mxu0 0.0
        %1312 = vmatprep.mubr.f32.mxu0 0.0
        %1313 = vmatmul.mubr.f32.gmra.mrb[0].mxu0 %v1102
        %v1314 = vpop.f32.mrb[0].mxu0
        %v1315 = vadd.f32 0.0, %v1314
        %v1316 = vpop.f32.mrb[0].mxu0
        %1317 = vmatprep.mubr.f32.mxu0 0.0
        %1318 = vmatmul.mubr.f32.gmra.mrb[0].mxu0 %v1105
        %v1319 = vpop.f32.mrb[0].mxu0
        %v1320 = vadd.f32 0.0, %v1319
        %v1321 = vpop.f32.mrb[0].mxu0
        %1322 = vmatprep.mubr.f32.mxu0 0.0
        %1323 = vmatmul.mubr.f32.gmra.mrb[0].mxu0 %v1108
        %v1324 = vpop.f32.mrb[0].mxu0
        %v1325 = vadd.f32 0.0, %v1324
        %v1326 = vpop.f32.mrb[0].mxu0
        %1327 = vmatprep.mubr.f32.mxu0 0.0
        %1328 = vmatmul.mubr.f32.gmra.mrb[0].mxu0 %v1111
        %v1329 = vpop.f32.mrb[0].mxu0
        %v1330 = vadd.f32 0.0, %v1329
        %v1331 = vpop.f32.mrb[0].mxu0
        %1332 = vmatprep.mubr.f32.mxu0 0.0
        %1333 = vmatmul.mubr.f32.gmra.mrb[0].mxu0 %v1114
        %v1334 = vpop.f32.mrb[0].mxu0
        %v1335 = vadd.f32 0.0, %v1334
        %v1336 = vpop.f32.mrb[0].mxu0
        %1337 = vmatprep.mubr.f32.mxu0 0.0
        %1338 = vmatmul.mubr.f32.gmra.mrb[0].mxu0 %v1117
        %v1339 = vpop.f32.mrb[0].mxu0
        %v1340 = vadd.f32 0.0, %v1339
        %v1341 = vpop.f32.mrb[0].mxu0
        %1342 = vmatprep.mubr.f32.mxu0 0.0
        %1343 = vmatmul.mubr.f32.gmra.mrb[0].mxu0 %v1120
        %v1344 = vpop.f32.mrb[0].mxu0
        %v1345 = vadd.f32 0.0, %v1344
        %v1346 = vpop.f32.mrb[0].mxu0
        %1347 = vmatprep.mubr.f32.mxu0 0.0
        %1348 = vmatmul.mubr.f32.gmra.mrb[0].mxu0 %v1123
        %v1349 = vpop.f32.mrb[0].mxu0
        %v1350 = vadd.f32 0.0, %v1349
        %v1351 = vpop.f32.mrb[0].mxu0
        %1352 = vmatprep.mubr.f32.mxu0 0.0
        %1353 = vmatmul.mubr.f32.gmra.mrb[0].mxu0 %v1126
        %v1354 = vpop.f32.mrb[0].mxu0
        %v1355 = vadd.f32 0.0, %v1354
        %v1356 = vpop.f32.mrb[0].mxu0
        %1357 = vmatprep.mubr.f32.mxu0 0.0
        %1358 = vmatmul.mubr.f32.gmra.mrb[0].mxu0 %v1129
        %v1359 = vpop.f32.mrb[0].mxu0
        %v1360 = vadd.f32 0.0, %v1359
        %v1361 = vpop.f32.mrb[0].mxu0
        %1362 = vmatprep.mubr.f32.mxu0 0.0
        %1363 = vmatmul.mubr.f32.gmra.mrb[0].mxu0 %v1132
        %v1364 = vpop.f32.mrb[0].mxu0
        %v1365 = vadd.f32 0.0, %v1364
        %v1366 = vpop.f32.mrb[0].mxu0
        %1367 = vmatprep.mubr.f32.mxu0 0.0
        %1368 = vmatmul.mubr.f32.gmra.mrb[0].mxu0 %v1135
        %v1369 = vpop.f32.mrb[0].mxu0
        %v1370 = vadd.f32 0.0, %v1369
        %v1371 = vpop.f32.mrb[0].mxu0
        %1372 = vmatprep.mubr.f32.mxu0 0.0
        %1373 = vmatmul.mubr.f32.gmra.mrb[0].mxu0 %v1138
        %v1374 = vpop.f32.mrb[0].mxu0
        %v1375 = vadd.f32 0.0, %v1374
        %v1376 = vpop.f32.mrb[0].mxu0
        %1377 = vmatprep.mubr.f32.mxu0 0.0
        %1378 = vmatmul.mubr.f32.gmra.mrb[0].mxu0 %v1141
        %v1379 = vpop.f32.mrb[0].mxu0
        %v1380 = vadd.f32 0.0, %v1379
        %v1381 = vpop.f32.mrb[0].mxu0
        %1382 = vmatprep.mubr.f32.mxu0 0.0
        %1383 = vmatmul.mubr.f32.gmra.mrb[0].mxu0 %v1144
        %v1384 = vpop.f32.mrb[0].mxu0
        %v1385 = vadd.f32 0.0, %v1384
        %v1386 = vpop.f32.mrb[0].mxu0
        %1387 = vmatprep.mubr.f32.mxu0 0.0
        %1388 = vmatmul.mubr.f32.gmra.mrb[0].mxu0 %v1147
        %v1389 = vpop.f32.mrb[0].mxu0
        %v1390 = vadd.f32 0.0, %v1389
        %v1391 = vpop.f32.mrb[0].mxu0
        %1392 = vmatprep.mubr.f32.mxu0 0.0
        %1393 = vmatmul.mubr.f32.gmra.mrb[0].mxu0 %v1150
        %v1394 = vpop.f32.mrb[0].mxu0
        %v1395 = vadd.f32 0.0, %v1394
        %v1396 = vpop.f32.mrb[0].mxu0
        %1397 = vmatprep.mubr.f32.mxu0 0.0
        %1398 = vmatmul.mubr.f32.gmra.mrb[0].mxu0 %v1153
        %v1399 = vpop.f32.mrb[0].mxu0
        %v1400 = vadd.f32 0.0, %v1399
        %v1401 = vpop.f32.mrb[0].mxu0
        %1402 = vmatprep.mubr.f32.mxu0 0.0
        %1403 = vmatmul.mubr.f32.gmra.mrb[0].mxu0 %v1156
        %v1404 = vpop.f32.mrb[0].mxu0
        %v1405 = vadd.f32 0.0, %v1404
        %v1406 = vpop.f32.mrb[0].mxu0
        %1407 = vmatprep.mubr.f32.mxu0 0.0
        %1408 = vmatmul.mubr.f32.gmra.mrb[0].mxu0 %v1159
        %v1409 = vpop.f32.mrb[0].mxu0
        %v1410 = vadd.f32 0.0, %v1409
        %v1411 = vpop.f32.mrb[0].mxu0
        %1412 = vmatprep.mubr.f32.mxu0 0.0
        %1413 = vmatmul.mubr.f32.gmra.mrb[0].mxu0 %v1162
        %v1414 = vpop.f32.mrb[0].mxu0
        %v1415 = vadd.f32 0.0, %v1414
        %v1416 = vpop.f32.mrb[0].mxu0
        %1417 = vmatprep.mubr.f32.mxu0 0.0
        %1418 = vmatmul.mubr.f32.gmra.mrb[0].mxu0 %v1165
        %v1419 = vpop.f32.mrb[0].mxu0
        %v1420 = vadd.f32 0.0, %v1419
        %v1421 = vpop.f32.mrb[0].mxu0
        %1422 = vmatprep.mubr.f32.mxu0 0.0
        %1423 = vmatmul.mubr.f32.gmra.mrb[0].mxu0 %v1168
        %v1424 = vpop.f32.mrb[0].mxu0
        %v1425 = vadd.f32 0.0, %v1424
        %v1426 = vpop.f32.mrb[0].mxu0
        %1427 = vmatprep.mubr.f32.mxu0 0.0
        %1428 = vmatmul.mubr.f32.gmra.mrb[0].mxu0 %v1171
        %v1429 = vpop.f32.mrb[0].mxu0
        %v1430 = vadd.f32 0.0, %v1429
        %v1431 = vpop.f32.mrb[0].mxu0
        %1432 = vmatprep.mubr.f32.mxu0 0.0
        %1433 = vmatmul.mubr.f32.gmra.mrb[0].mxu0 %v1174
        %v1434 = vpop.f32.mrb[0].mxu0
        %v1435 = vadd.f32 0.0, %v1434
        %v1436 = vpop.f32.mrb[0].mxu0
        %1437 = vmatprep.mubr.f32.mxu0 0.0
        %1438 = vmatmul.mubr.f32.gmra.mrb[0].mxu0 %v1177
        %v1439 = vpop.f32.mrb[0].mxu0
        %v1440 = vadd.f32 0.0, %v1439
        %v1441 = vpop.f32.mrb[0].mxu0
        %1442 = vmatprep.mubr.f32.mxu0 0.0
        %1443 = vmatmul.mubr.f32.gmra.mrb[0].mxu0 %v1180
        %v1444 = vpop.f32.mrb[0].mxu0
        %v1445 = vadd.f32 0.0, %v1444
        %v1446 = vpop.f32.mrb[0].mxu0
        %1447 = vmatprep.mubr.f32.mxu0 0.0
        %1448 = vmatmul.mubr.f32.gmra.mrb[0].mxu0 %v1183
        %v1449 = vpop.f32.mrb[0].mxu0
        %v1450 = vadd.f32 0.0, %v1449
        %v1451 = vpop.f32.mrb[0].mxu0
        %1452 = vmatprep.mubr.f32.mxu0 0.0
        %1453 = vmatmul.mubr.f32.gmra.mrb[0].mxu0 %v1186
        %v1454 = vpop.f32.mrb[0].mxu0
        %v1455 = vadd.f32 0.0, %v1454
        %v1456 = vpop.f32.mrb[0].mxu0
        %1457 = vmatprep.mubr.f32.mxu0 0.0
        %1458 = vmatmul.mubr.f32.gmra.mrb[0].mxu0 %v1189
        %v1459 = vpop.f32.mrb[0].mxu0
        %v1460 = vadd.f32 0.0, %v1459
        %v1461 = vpop.f32.mrb[0].mxu0
        %1462 = vmatprep.mubr.f32.mxu0 0.0
        %1463 = vmatmul.mubr.f32.gmra.mrb[0].mxu0 %v1192
        %v1464 = vpop.f32.mrb[0].mxu0
        %v1465 = vadd.f32 0.0, %v1464
        %v1466 = vpop.f32.mrb[0].mxu0
        %1467 = vmatprep.mubr.f32.mxu0 0.0
        %1468 = vmatmul.mubr.f32.gmra.mrb[0].mxu0 %v1195
        %v1469 = vpop.f32.mrb[0].mxu0
        %v1470 = vadd.f32 0.0, %v1469
        %v1471 = vpop.f32.mrb[0].mxu0
        %1472 = vmatprep.mubr.f32.mxu0 0.0
        %1473 = vmatmul.mubr.f32.gmra.mrb[0].mxu0 %v1198
        %v1474 = vpop.f32.mrb[0].mxu0
        %v1475 = vadd.f32 0.0, %v1474
        %v1476 = vpop.f32.mrb[0].mxu0
        %1477 = vmatprep.mubr.f32.mxu0 0.0
        %1478 = vmatmul.mubr.f32.gmra.mrb[0].mxu0 %v1201
        %v1479 = vpop.f32.mrb[0].mxu0
        %v1480 = vadd.f32 0.0, %v1479
        %v1481 = vpop.f32.mrb[0].mxu0
        %1482 = vmatprep.mubr.f32.mxu0 0.0
        %1483 = vmatmul.mubr.f32.gmra.mrb[0].mxu0 %v1204
        %v1484 = vpop.f32.mrb[0].mxu0
        %v1485 = vadd.f32 0.0, %v1484
        %v1486 = vpop.f32.mrb[0].mxu0
        %1487 = vmatprep.mubr.f32.mxu0 0.0
        %1488 = vmatmul.mubr.f32.gmra.mrb[0].mxu0 %v1207
        %v1489 = vpop.f32.mrb[0].mxu0
        %v1490 = vadd.f32 0.0, %v1489
        %v1491 = vpop.f32.mrb[0].mxu0
        %1492 = vmatprep.mubr.f32.mxu0 0.0
        %1493 = vmatmul.mubr.f32.gmra.mrb[0].mxu0 %v1210
        %v1494 = vpop.f32.mrb[0].mxu0
        %v1495 = vadd.f32 0.0, %v1494
        %v1496 = vpop.f32.mrb[0].mxu0
        %1497 = vmatprep.mubr.f32.mxu0 0.0
        %1498 = vmatmul.mubr.f32.gmra.mrb[0].mxu0 %v1213
        %v1499 = vpop.f32.mrb[0].mxu0
        %v1500 = vadd.f32 0.0, %v1499
        %v1501 = vpop.f32.mrb[0].mxu0
        %1502 = vmatprep.mubr.f32.mxu0 0.0
        %1503 = vmatmul.mubr.f32.gmra.mrb[0].mxu0 %v1216
        %v1504 = vpop.f32.mrb[0].mxu0
        %v1505 = vadd.f32 0.0, %v1504
        %v1506 = vpop.f32.mrb[0].mxu0
        %1507 = vmatprep.mubr.f32.mxu0 0.0
        %1508 = vmatmul.mubr.f32.gmra.mrb[0].mxu0 %v1219
        %v1509 = vpop.f32.mrb[0].mxu0
        %v1510 = vadd.f32 0.0, %v1509
        %v1511 = vpop.f32.mrb[0].mxu0
        %1512 = vmatprep.mubr.f32.mxu0 0.0
        %1513 = vmatmul.mubr.f32.gmra.mrb[0].mxu0 %v1222
        %v1514 = vpop.f32.mrb[0].mxu0
        %v1515 = vadd.f32 0.0, %v1514
        %v1516 = vpop.f32.mrb[0].mxu0
        %1517 = vmatprep.mubr.f32.mxu0 0.0
        %1518 = vmatmul.mubr.f32.gmra.mrb[0].mxu0 %v1225
        %v1519 = vpop.f32.mrb[0].mxu0
        %v1520 = vadd.f32 0.0, %v1519
        %v1521 = vpop.f32.mrb[0].mxu0
        %1522 = vmatprep.mubr.f32.mxu0 0.0
        %1523 = vmatmul.mubr.f32.gmra.mrb[0].mxu0 %v1228
        %v1524 = vpop.f32.mrb[0].mxu0
        %v1525 = vadd.f32 0.0, %v1524
        %v1526 = vpop.f32.mrb[0].mxu0
        %1527 = vmatprep.mubr.f32.mxu0 0.0
        %1528 = vmatmul.mubr.f32.gmra.mrb[0].mxu0 %v1231
        %v1529 = vpop.f32.mrb[0].mxu0
        %v1530 = vadd.f32 0.0, %v1529
        %v1531 = vpop.f32.mrb[0].mxu0
        %1532 = vmatprep.mubr.f32.mxu0 0.0
        %1533 = vmatmul.mubr.f32.gmra.mrb[0].mxu0 %v1234
        %v1534 = vpop.f32.mrb[0].mxu0
        %v1535 = vadd.f32 0.0, %v1534
        %v1536 = vpop.f32.mrb[0].mxu0
        %1537 = vmatprep.mubr.f32.mxu0 0.0
        %1538 = vmatmul.mubr.f32.gmra.mrb[0].mxu0 %v1237
        %v1539 = vpop.f32.mrb[0].mxu0
        %v1540 = vadd.f32 0.0, %v1539
        %v1541 = vpop.f32.mrb[0].mxu0
        %1542 = vmatprep.mubr.f32.mxu0 0.0
        %1543 = vmatmul.mubr.f32.gmra.mrb[0].mxu0 %v1240
        %v1544 = vpop.f32.mrb[0].mxu0
        %v1545 = vadd.f32 0.0, %v1544
        %v1546 = vpop.f32.mrb[0].mxu0
        %1547 = vmatprep.mubr.f32.mxu0 0.0
        %1548 = vmatmul.mubr.f32.gmra.mrb[0].mxu0 %v1243
        %v1549 = vpop.f32.mrb[0].mxu0
        %v1550 = vadd.f32 0.0, %v1549
        %v1551 = vpop.f32.mrb[0].mxu0
        %1552 = vdwg.mxu0
        %v1553 = vadd.f32 %v812, %v1315
        %v1554 = vadd.f32 %v817, %v1320
        %v1555 = vadd.f32 %v822, %v1325
        %v1556 = vadd.f32 %v827, %v1330
        %v1557 = vadd.f32 %v832, %v1335
        %v1558 = vadd.f32 %v837, %v1340
        %v1559 = vadd.f32 %v842, %v1345
        %v1560 = vadd.f32 %v847, %v1350
        %v1561 = vadd.f32 %v852, %v1355
        %v1562 = vadd.f32 %v857, %v1360
        %v1563 = vadd.f32 %v862, %v1365
        %v1564 = vadd.f32 %v867, %v1370
        %v1565 = vadd.f32 %v872, %v1375
        %v1566 = vadd.f32 %v877, %v1380
        %v1567 = vadd.f32 %v882, %v1385
        %v1568 = vadd.f32 %v887, %v1390
        %v1569 = vadd.f32 %v892, %v1395
        %v1570 = vadd.f32 %v897, %v1400
        %v1571 = vadd.f32 %v902, %v1405
        %v1572 = vadd.f32 %v907, %v1410
        %v1573 = vadd.f32 %v912, %v1415
        %v1574 = vadd.f32 %v917, %v1420
        %v1575 = vadd.f32 %v922, %v1425
        %v1576 = vadd.f32 %v927, %v1430
        %v1577 = vadd.f32 %v932, %v1435
        %v1578 = vadd.f32 %v937, %v1440
        %v1579 = vadd.f32 %v942, %v1445
        %v1580 = vadd.f32 %v947, %v1450
        %v1581 = vadd.f32 %v952, %v1455
        %v1582 = vadd.f32 %v957, %v1460
        %v1583 = vadd.f32 %v962, %v1465
        %v1584 = vadd.f32 %v967, %v1470
        %v1585 = vadd.f32 %v972, %v1475
        %v1586 = vadd.f32 %v977, %v1480
        %v1587 = vadd.f32 %v982, %v1485
        %v1588 = vadd.f32 %v987, %v1490
        %v1589 = vadd.f32 %v992, %v1495
        %v1590 = vadd.f32 %v997, %v1500
        %v1591 = vadd.f32 %v1002, %v1505
        %v1592 = vadd.f32 %v1007, %v1510
        %v1593 = vadd.f32 %v1012, %v1515
        %v1594 = vadd.f32 %v1017, %v1520
        %v1595 = vadd.f32 %v1022, %v1525
        %v1596 = vadd.f32 %v1027, %v1530
        %v1597 = vadd.f32 %v1032, %v1535
        %v1598 = vadd.f32 %v1037, %v1540
        %v1599 = vadd.f32 %v1042, %v1545
        %v1600 = vadd.f32 %v1047, %v1550
        %v1601 = vld [vmem:[%s2] sm:$0x1]
        %v1602 = vlaneseq
        %v1603 = vshrl.u32 %v1602, 7
        %v1604 = vadd.s32 %v1603, 8
        %v1605 = vadd.s32 %v1603, 16
        %v1606 = vadd.s32 %v1603, 24
        %v1607 = vadd.s32 %v1603, 32
        %v1608 = vadd.s32 %v1603, 40
        %v1609 = vadd.s32 %v1603, 48
        %v1610 = vadd.s32 %v1603, 56
        %v1611 = vadd.s32 %v1603, 64
        %v1612 = vadd.s32 %v1603, 72
        %v1613 = vadd.s32 %v1603, 80
        %v1614 = vadd.s32 %v1603, 88
        %v1615 = vadd.s32 %v1603, 96
        %v1616 = vadd.s32 %v1603, 104
        %v1617 = vadd.s32 %v1603, 112
        %v1618 = vadd.s32 %v1603, 120
        %v1619 = vadd.s32 %v1603, 128
        %v1620 = vadd.s32 %v1603, 136
        %v1621 = vadd.s32 %v1603, 144
        %v1622 = vadd.s32 %v1603, 152
        %v1623 = vadd.s32 %v1603, 160
        %v1624 = vadd.s32 %v1603, 168
        %v1625 = vadd.s32 %v1603, 176
        %v1626 = vadd.s32 %v1603, 184
        %v1627 = vadd.s32 %v1603, 192
        %v1628 = vadd.s32 %v1603, 200
        %v1629 = vadd.s32 %v1603, 208
        %v1630 = vadd.s32 %v1603, 216
        %v1631 = vadd.s32 %v1603, 224
        %v1632 = vadd.s32 %v1603, 232
        %v1633 = vadd.s32 %v1603, 240
        %v1634 = vadd.s32 %v1603, 248
        %v1635 = vadd.s32 %v1603, 256
        %v1636 = vadd.s32 %v1603, 264
        %v1637 = vadd.s32 %v1603, 272
        %v1638 = vadd.s32 %v1603, 280
        %v1639 = vadd.s32 %v1603, 288
        %v1640 = vadd.s32 %v1603, 296
        %v1641 = vadd.s32 %v1603, 304
        %v1642 = vadd.s32 %v1603, 312
        %v1643 = vadd.s32 %v1603, 320
        %v1644 = vadd.s32 %v1603, 328
        %v1645 = vadd.s32 %v1603, 336
        %v1646 = vadd.s32 %v1603, 344
        %v1647 = vadd.s32 %v1603, 352
        %v1648 = vadd.s32 %v1603, 360
        %v1649 = vadd.s32 %v1603, 368
        %v1650 = vadd.s32 %v1603, 376
        %vm1651 = vcmp.lt.s32.totalorder %v1603, 0
        %v1652 = vsub.s32 0, %v1603
        %v1653 = vsel %vm1651, %v1652, %v1603
        %v1654 = vmul.u32.u64.compose %v1653, 2863311531
        %v1655 = vextract.low.u32 %v1654
        %v1656 = vextract.high.u32 %v1654
        %v1657 = vshrl.u32 %v1656, 4
        %v1658 = vmul.u32 %v1657, 24
        %v1659 = vsub.s32 %v1653, %v1658
        %v1660 = vsub.s32 0, %v1659
        %v1661 = vsel %vm1651, %v1660, %v1659
        %vm1662 = vcmp.lt.s32.totalorder %v1604, 0
        %v1663 = vsub.s32 0, %v1604
        %v1664 = vsel %vm1662, %v1663, %v1604
        %v1665 = vmul.u32.u64.compose %v1664, 2863311531
        %v1666 = vextract.low.u32 %v1665
        %v1667 = vextract.high.u32 %v1665
        %v1668 = vshrl.u32 %v1667, 4
        %v1669 = vmul.u32 %v1668, 24
        %v1670 = vsub.s32 %v1664, %v1669
        %v1671 = vsub.s32 0, %v1670
        %v1672 = vsel %vm1662, %v1671, %v1670
        %vm1673 = vcmp.lt.s32.totalorder %v1605, 0
        %v1674 = vsub.s32 0, %v1605
        %v1675 = vsel %vm1673, %v1674, %v1605
        %v1676 = vmul.u32.u64.compose %v1675, 2863311531
        %v1677 = vextract.low.u32 %v1676
        %v1678 = vextract.high.u32 %v1676
        %v1679 = vshrl.u32 %v1678, 4
        %v1680 = vmul.u32 %v1679, 24
        %v1681 = vsub.s32 %v1675, %v1680
        %v1682 = vsub.s32 0, %v1681
        %v1683 = vsel %vm1673, %v1682, %v1681
        %vm1684 = vcmp.lt.s32.totalorder %v1606, 0
        %v1685 = vsub.s32 0, %v1606
        %v1686 = vsel %vm1684, %v1685, %v1606
        %v1687 = vmul.u32.u64.compose %v1686, 2863311531
        %v1688 = vextract.low.u32 %v1687
        %v1689 = vextract.high.u32 %v1687
        %v1690 = vshrl.u32 %v1689, 4
        %v1691 = vmul.u32 %v1690, 24
        %v1692 = vsub.s32 %v1686, %v1691
        %v1693 = vsub.s32 0, %v1692
        %v1694 = vsel %vm1684, %v1693, %v1692
        %vm1695 = vcmp.lt.s32.totalorder %v1607, 0
        %v1696 = vsub.s32 0, %v1607
        %v1697 = vsel %vm1695, %v1696, %v1607
        %v1698 = vmul.u32.u64.compose %v1697, 2863311531
        %v1699 = vextract.low.u32 %v1698
        %v1700 = vextract.high.u32 %v1698
        %v1701 = vshrl.u32 %v1700, 4
        %v1702 = vmul.u32 %v1701, 24
        %v1703 = vsub.s32 %v1697, %v1702
        %v1704 = vsub.s32 0, %v1703
        %v1705 = vsel %vm1695, %v1704, %v1703
        %vm1706 = vcmp.lt.s32.totalorder %v1608, 0
        %v1707 = vsub.s32 0, %v1608
        %v1708 = vsel %vm1706, %v1707, %v1608
        %v1709 = vmul.u32.u64.compose %v1708, 2863311531
        %v1710 = vextract.low.u32 %v1709
        %v1711 = vextract.high.u32 %v1709
        %v1712 = vshrl.u32 %v1711, 4
        %v1713 = vmul.u32 %v1712, 24
        %v1714 = vsub.s32 %v1708, %v1713
        %v1715 = vsub.s32 0, %v1714
        %v1716 = vsel %vm1706, %v1715, %v1714
        %vm1717 = vcmp.lt.s32.totalorder %v1609, 0
        %v1718 = vsub.s32 0, %v1609
        %v1719 = vsel %vm1717, %v1718, %v1609
        %v1720 = vmul.u32.u64.compose %v1719, 2863311531
        %v1721 = vextract.low.u32 %v1720
        %v1722 = vextract.high.u32 %v1720
        %v1723 = vshrl.u32 %v1722, 4
        %v1724 = vmul.u32 %v1723, 24
        %v1725 = vsub.s32 %v1719, %v1724
        %v1726 = vsub.s32 0, %v1725
        %v1727 = vsel %vm1717, %v1726, %v1725
        %vm1728 = vcmp.lt.s32.totalorder %v1610, 0
        %v1729 = vsub.s32 0, %v1610
        %v1730 = vsel %vm1728, %v1729, %v1610
        %v1731 = vmul.u32.u64.compose %v1730, 2863311531
        %v1732 = vextract.low.u32 %v1731
        %v1733 = vextract.high.u32 %v1731
        %v1734 = vshrl.u32 %v1733, 4
        %v1735 = vmul.u32 %v1734, 24
        %v1736 = vsub.s32 %v1730, %v1735
        %v1737 = vsub.s32 0, %v1736
        %v1738 = vsel %vm1728, %v1737, %v1736
        %vm1739 = vcmp.lt.s32.totalorder %v1611, 0
        %v1740 = vsub.s32 0, %v1611
        %v1741 = vsel %vm1739, %v1740, %v1611
        %v1742 = vmul.u32.u64.compose %v1741, 2863311531
        %v1743 = vextract.low.u32 %v1742
        %v1744 = vextract.high.u32 %v1742
        %v1745 = vshrl.u32 %v1744, 4
        %v1746 = vmul.u32 %v1745, 24
        %v1747 = vsub.s32 %v1741, %v1746
        %v1748 = vsub.s32 0, %v1747
        %v1749 = vsel %vm1739, %v1748, %v1747
        %vm1750 = vcmp.lt.s32.totalorder %v1612, 0
        %v1751 = vsub.s32 0, %v1612
        %v1752 = vsel %vm1750, %v1751, %v1612
        %v1753 = vmul.u32.u64.compose %v1752, 2863311531
        %v1754 = vextract.low.u32 %v1753
        %v1755 = vextract.high.u32 %v1753
        %v1756 = vshrl.u32 %v1755, 4
        %v1757 = vmul.u32 %v1756, 24
        %v1758 = vsub.s32 %v1752, %v1757
        %v1759 = vsub.s32 0, %v1758
        %v1760 = vsel %vm1750, %v1759, %v1758
        %vm1761 = vcmp.lt.s32.totalorder %v1613, 0
        %v1762 = vsub.s32 0, %v1613
        %v1763 = vsel %vm1761, %v1762, %v1613
        %v1764 = vmul.u32.u64.compose %v1763, 2863311531
        %v1765 = vextract.low.u32 %v1764
        %v1766 = vextract.high.u32 %v1764
        %v1767 = vshrl.u32 %v1766, 4
        %v1768 = vmul.u32 %v1767, 24
        %v1769 = vsub.s32 %v1763, %v1768
        %v1770 = vsub.s32 0, %v1769
        %v1771 = vsel %vm1761, %v1770, %v1769
        %vm1772 = vcmp.lt.s32.totalorder %v1614, 0
        %v1773 = vsub.s32 0, %v1614
        %v1774 = vsel %vm1772, %v1773, %v1614
        %v1775 = vmul.u32.u64.compose %v1774, 2863311531
        %v1776 = vextract.low.u32 %v1775
        %v1777 = vextract.high.u32 %v1775
        %v1778 = vshrl.u32 %v1777, 4
        %v1779 = vmul.u32 %v1778, 24
        %v1780 = vsub.s32 %v1774, %v1779
        %v1781 = vsub.s32 0, %v1780
        %v1782 = vsel %vm1772, %v1781, %v1780
        %vm1783 = vcmp.lt.s32.totalorder %v1615, 0
        %v1784 = vsub.s32 0, %v1615
        %v1785 = vsel %vm1783, %v1784, %v1615
        %v1786 = vmul.u32.u64.compose %v1785, 2863311531
        %v1787 = vextract.low.u32 %v1786
        %v1788 = vextract.high.u32 %v1786
        %v1789 = vshrl.u32 %v1788, 4
        %v1790 = vmul.u32 %v1789, 24
        %v1791 = vsub.s32 %v1785, %v1790
        %v1792 = vsub.s32 0, %v1791
        %v1793 = vsel %vm1783, %v1792, %v1791
        %vm1794 = vcmp.lt.s32.totalorder %v1616, 0
        %v1795 = vsub.s32 0, %v1616
        %v1796 = vsel %vm1794, %v1795, %v1616
        %v1797 = vmul.u32.u64.compose %v1796, 2863311531
        %v1798 = vextract.low.u32 %v1797
        %v1799 = vextract.high.u32 %v1797
        %v1800 = vshrl.u32 %v1799, 4
        %v1801 = vmul.u32 %v1800, 24
        %v1802 = vsub.s32 %v1796, %v1801
        %v1803 = vsub.s32 0, %v1802
        %v1804 = vsel %vm1794, %v1803, %v1802
        %vm1805 = vcmp.lt.s32.totalorder %v1617, 0
        %v1806 = vsub.s32 0, %v1617
        %v1807 = vsel %vm1805, %v1806, %v1617
        %v1808 = vmul.u32.u64.compose %v1807, 2863311531
        %v1809 = vextract.low.u32 %v1808
        %v1810 = vextract.high.u32 %v1808
        %v1811 = vshrl.u32 %v1810, 4
        %v1812 = vmul.u32 %v1811, 24
        %v1813 = vsub.s32 %v1807, %v1812
        %v1814 = vsub.s32 0, %v1813
        %v1815 = vsel %vm1805, %v1814, %v1813
        %vm1816 = vcmp.lt.s32.totalorder %v1618, 0
        %v1817 = vsub.s32 0, %v1618
        %v1818 = vsel %vm1816, %v1817, %v1618
        %v1819 = vmul.u32.u64.compose %v1818, 2863311531
        %v1820 = vextract.low.u32 %v1819
        %v1821 = vextract.high.u32 %v1819
        %v1822 = vshrl.u32 %v1821, 4
        %v1823 = vmul.u32 %v1822, 24
        %v1824 = vsub.s32 %v1818, %v1823
        %v1825 = vsub.s32 0, %v1824
        %v1826 = vsel %vm1816, %v1825, %v1824
        %vm1827 = vcmp.lt.s32.totalorder %v1619, 0
        %v1828 = vsub.s32 0, %v1619
        %v1829 = vsel %vm1827, %v1828, %v1619
        %v1830 = vmul.u32.u64.compose %v1829, 2863311531
        %v1831 = vextract.low.u32 %v1830
        %v1832 = vextract.high.u32 %v1830
        %v1833 = vshrl.u32 %v1832, 4
        %v1834 = vmul.u32 %v1833, 24
        %v1835 = vsub.s32 %v1829, %v1834
        %v1836 = vsub.s32 0, %v1835
        %v1837 = vsel %vm1827, %v1836, %v1835
        %vm1838 = vcmp.lt.s32.totalorder %v1620, 0
        %v1839 = vsub.s32 0, %v1620
        %v1840 = vsel %vm1838, %v1839, %v1620
        %v1841 = vmul.u32.u64.compose %v1840, 2863311531
        %v1842 = vextract.low.u32 %v1841
        %v1843 = vextract.high.u32 %v1841
        %v1844 = vshrl.u32 %v1843, 4
        %v1845 = vmul.u32 %v1844, 24
        %v1846 = vsub.s32 %v1840, %v1845
        %v1847 = vsub.s32 0, %v1846
        %v1848 = vsel %vm1838, %v1847, %v1846
        %vm1849 = vcmp.lt.s32.totalorder %v1621, 0
        %v1850 = vsub.s32 0, %v1621
        %v1851 = vsel %vm1849, %v1850, %v1621
        %v1852 = vmul.u32.u64.compose %v1851, 2863311531
        %v1853 = vextract.low.u32 %v1852
        %v1854 = vextract.high.u32 %v1852
        %v1855 = vshrl.u32 %v1854, 4
        %v1856 = vmul.u32 %v1855, 24
        %v1857 = vsub.s32 %v1851, %v1856
        %v1858 = vsub.s32 0, %v1857
        %v1859 = vsel %vm1849, %v1858, %v1857
        %vm1860 = vcmp.lt.s32.totalorder %v1622, 0
        %v1861 = vsub.s32 0, %v1622
        %v1862 = vsel %vm1860, %v1861, %v1622
        %v1863 = vmul.u32.u64.compose %v1862, 2863311531
        %v1864 = vextract.low.u32 %v1863
        %v1865 = vextract.high.u32 %v1863
        %v1866 = vshrl.u32 %v1865, 4
        %v1867 = vmul.u32 %v1866, 24
        %v1868 = vsub.s32 %v1862, %v1867
        %v1869 = vsub.s32 0, %v1868
        %v1870 = vsel %vm1860, %v1869, %v1868
        %vm1871 = vcmp.lt.s32.totalorder %v1623, 0
        %v1872 = vsub.s32 0, %v1623
        %v1873 = vsel %vm1871, %v1872, %v1623
        %v1874 = vmul.u32.u64.compose %v1873, 2863311531
        %v1875 = vextract.low.u32 %v1874
        %v1876 = vextract.high.u32 %v1874
        %v1877 = vshrl.u32 %v1876, 4
        %v1878 = vmul.u32 %v1877, 24
        %v1879 = vsub.s32 %v1873, %v1878
        %v1880 = vsub.s32 0, %v1879
        %v1881 = vsel %vm1871, %v1880, %v1879
        %vm1882 = vcmp.lt.s32.totalorder %v1624, 0
        %v1883 = vsub.s32 0, %v1624
        %v1884 = vsel %vm1882, %v1883, %v1624
        %v1885 = vmul.u32.u64.compose %v1884, 2863311531
        %v1886 = vextract.low.u32 %v1885
        %v1887 = vextract.high.u32 %v1885
        %v1888 = vshrl.u32 %v1887, 4
        %v1889 = vmul.u32 %v1888, 24
        %v1890 = vsub.s32 %v1884, %v1889
        %v1891 = vsub.s32 0, %v1890
        %v1892 = vsel %vm1882, %v1891, %v1890
        %vm1893 = vcmp.lt.s32.totalorder %v1625, 0
        %v1894 = vsub.s32 0, %v1625
        %v1895 = vsel %vm1893, %v1894, %v1625
        %v1896 = vmul.u32.u64.compose %v1895, 2863311531
        %v1897 = vextract.low.u32 %v1896
        %v1898 = vextract.high.u32 %v1896
        %v1899 = vshrl.u32 %v1898, 4
        %v1900 = vmul.u32 %v1899, 24
        %v1901 = vsub.s32 %v1895, %v1900
        %v1902 = vsub.s32 0, %v1901
        %v1903 = vsel %vm1893, %v1902, %v1901
        %vm1904 = vcmp.lt.s32.totalorder %v1626, 0
        %v1905 = vsub.s32 0, %v1626
        %v1906 = vsel %vm1904, %v1905, %v1626
        %v1907 = vmul.u32.u64.compose %v1906, 2863311531
        %v1908 = vextract.low.u32 %v1907
        %v1909 = vextract.high.u32 %v1907
        %v1910 = vshrl.u32 %v1909, 4
        %v1911 = vmul.u32 %v1910, 24
        %v1912 = vsub.s32 %v1906, %v1911
        %v1913 = vsub.s32 0, %v1912
        %v1914 = vsel %vm1904, %v1913, %v1912
        %vm1915 = vcmp.lt.s32.totalorder %v1627, 0
        %v1916 = vsub.s32 0, %v1627
        %v1917 = vsel %vm1915, %v1916, %v1627
        %v1918 = vmul.u32.u64.compose %v1917, 2863311531
        %v1919 = vextract.low.u32 %v1918
        %v1920 = vextract.high.u32 %v1918
        %v1921 = vshrl.u32 %v1920, 4
        %v1922 = vmul.u32 %v1921, 24
        %v1923 = vsub.s32 %v1917, %v1922
        %v1924 = vsub.s32 0, %v1923
        %v1925 = vsel %vm1915, %v1924, %v1923
        %vm1926 = vcmp.lt.s32.totalorder %v1628, 0
        %v1927 = vsub.s32 0, %v1628
        %v1928 = vsel %vm1926, %v1927, %v1628
        %v1929 = vmul.u32.u64.compose %v1928, 2863311531
        %v1930 = vextract.low.u32 %v1929
        %v1931 = vextract.high.u32 %v1929
        %v1932 = vshrl.u32 %v1931, 4
        %v1933 = vmul.u32 %v1932, 24
        %v1934 = vsub.s32 %v1928, %v1933
        %v1935 = vsub.s32 0, %v1934
        %v1936 = vsel %vm1926, %v1935, %v1934
        %vm1937 = vcmp.lt.s32.totalorder %v1629, 0
        %v1938 = vsub.s32 0, %v1629
        %v1939 = vsel %vm1937, %v1938, %v1629
        %v1940 = vmul.u32.u64.compose %v1939, 2863311531
        %v1941 = vextract.low.u32 %v1940
        %v1942 = vextract.high.u32 %v1940
        %v1943 = vshrl.u32 %v1942, 4
        %v1944 = vmul.u32 %v1943, 24
        %v1945 = vsub.s32 %v1939, %v1944
        %v1946 = vsub.s32 0, %v1945
        %v1947 = vsel %vm1937, %v1946, %v1945
        %vm1948 = vcmp.lt.s32.totalorder %v1630, 0
        %v1949 = vsub.s32 0, %v1630
        %v1950 = vsel %vm1948, %v1949, %v1630
        %v1951 = vmul.u32.u64.compose %v1950, 2863311531
        %v1952 = vextract.low.u32 %v1951
        %v1953 = vextract.high.u32 %v1951
        %v1954 = vshrl.u32 %v1953, 4
        %v1955 = vmul.u32 %v1954, 24
        %v1956 = vsub.s32 %v1950, %v1955
        %v1957 = vsub.s32 0, %v1956
        %v1958 = vsel %vm1948, %v1957, %v1956
        %vm1959 = vcmp.lt.s32.totalorder %v1631, 0
        %v1960 = vsub.s32 0, %v1631
        %v1961 = vsel %vm1959, %v1960, %v1631
        %v1962 = vmul.u32.u64.compose %v1961, 2863311531
        %v1963 = vextract.low.u32 %v1962
        %v1964 = vextract.high.u32 %v1962
        %v1965 = vshrl.u32 %v1964, 4
        %v1966 = vmul.u32 %v1965, 24
        %v1967 = vsub.s32 %v1961, %v1966
        %v1968 = vsub.s32 0, %v1967
        %v1969 = vsel %vm1959, %v1968, %v1967
        %vm1970 = vcmp.lt.s32.totalorder %v1632, 0
        %v1971 = vsub.s32 0, %v1632
        %v1972 = vsel %vm1970, %v1971, %v1632
        %v1973 = vmul.u32.u64.compose %v1972, 2863311531
        %v1974 = vextract.low.u32 %v1973
        %v1975 = vextract.high.u32 %v1973
        %v1976 = vshrl.u32 %v1975, 4
        %v1977 = vmul.u32 %v1976, 24
        %v1978 = vsub.s32 %v1972, %v1977
        %v1979 = vsub.s32 0, %v1978
        %v1980 = vsel %vm1970, %v1979, %v1978
        %vm1981 = vcmp.lt.s32.totalorder %v1633, 0
        %v1982 = vsub.s32 0, %v1633
        %v1983 = vsel %vm1981, %v1982, %v1633
        %v1984 = vmul.u32.u64.compose %v1983, 2863311531
        %v1985 = vextract.low.u32 %v1984
        %v1986 = vextract.high.u32 %v1984
        %v1987 = vshrl.u32 %v1986, 4
        %v1988 = vmul.u32 %v1987, 24
        %v1989 = vsub.s32 %v1983, %v1988
        %v1990 = vsub.s32 0, %v1989
        %v1991 = vsel %vm1981, %v1990, %v1989
        %vm1992 = vcmp.lt.s32.totalorder %v1634, 0
        %v1993 = vsub.s32 0, %v1634
        %v1994 = vsel %vm1992, %v1993, %v1634
        %v1995 = vmul.u32.u64.compose %v1994, 2863311531
        %v1996 = vextract.low.u32 %v1995
        %v1997 = vextract.high.u32 %v1995
        %v1998 = vshrl.u32 %v1997, 4
        %v1999 = vmul.u32 %v1998, 24
        %v2000 = vsub.s32 %v1994, %v1999
        %v2001 = vsub.s32 0, %v2000
        %v2002 = vsel %vm1992, %v2001, %v2000
        %vm2003 = vcmp.lt.s32.totalorder %v1635, 0
        %v2004 = vsub.s32 0, %v1635
        %v2005 = vsel %vm2003, %v2004, %v1635
        %v2006 = vmul.u32.u64.compose %v2005, 2863311531
        %v2007 = vextract.low.u32 %v2006
        %v2008 = vextract.high.u32 %v2006
        %v2009 = vshrl.u32 %v2008, 4
        %v2010 = vmul.u32 %v2009, 24
        %v2011 = vsub.s32 %v2005, %v2010
        %v2012 = vsub.s32 0, %v2011
        %v2013 = vsel %vm2003, %v2012, %v2011
        %vm2014 = vcmp.lt.s32.totalorder %v1636, 0
        %v2015 = vsub.s32 0, %v1636
        %v2016 = vsel %vm2014, %v2015, %v1636
        %v2017 = vmul.u32.u64.compose %v2016, 2863311531
        %v2018 = vextract.low.u32 %v2017
        %v2019 = vextract.high.u32 %v2017
        %v2020 = vshrl.u32 %v2019, 4
        %v2021 = vmul.u32 %v2020, 24
        %v2022 = vsub.s32 %v2016, %v2021
        %v2023 = vsub.s32 0, %v2022
        %v2024 = vsel %vm2014, %v2023, %v2022
        %vm2025 = vcmp.lt.s32.totalorder %v1637, 0
        %v2026 = vsub.s32 0, %v1637
        %v2027 = vsel %vm2025, %v2026, %v1637
        %v2028 = vmul.u32.u64.compose %v2027, 2863311531
        %v2029 = vextract.low.u32 %v2028
        %v2030 = vextract.high.u32 %v2028
        %v2031 = vshrl.u32 %v2030, 4
        %v2032 = vmul.u32 %v2031, 24
        %v2033 = vsub.s32 %v2027, %v2032
        %v2034 = vsub.s32 0, %v2033
        %v2035 = vsel %vm2025, %v2034, %v2033
        %vm2036 = vcmp.lt.s32.totalorder %v1638, 0
        %v2037 = vsub.s32 0, %v1638
        %v2038 = vsel %vm2036, %v2037, %v1638
        %v2039 = vmul.u32.u64.compose %v2038, 2863311531
        %v2040 = vextract.low.u32 %v2039
        %v2041 = vextract.high.u32 %v2039
        %v2042 = vshrl.u32 %v2041, 4
        %v2043 = vmul.u32 %v2042, 24
        %v2044 = vsub.s32 %v2038, %v2043
        %v2045 = vsub.s32 0, %v2044
        %v2046 = vsel %vm2036, %v2045, %v2044
        %vm2047 = vcmp.lt.s32.totalorder %v1639, 0
        %v2048 = vsub.s32 0, %v1639
        %v2049 = vsel %vm2047, %v2048, %v1639
        %v2050 = vmul.u32.u64.compose %v2049, 2863311531
        %v2051 = vextract.low.u32 %v2050
        %v2052 = vextract.high.u32 %v2050
        %v2053 = vshrl.u32 %v2052, 4
        %v2054 = vmul.u32 %v2053, 24
        %v2055 = vsub.s32 %v2049, %v2054
        %v2056 = vsub.s32 0, %v2055
        %v2057 = vsel %vm2047, %v2056, %v2055
        %vm2058 = vcmp.lt.s32.totalorder %v1640, 0
        %v2059 = vsub.s32 0, %v1640
        %v2060 = vsel %vm2058, %v2059, %v1640
        %v2061 = vmul.u32.u64.compose %v2060, 2863311531
        %v2062 = vextract.low.u32 %v2061
        %v2063 = vextract.high.u32 %v2061
        %v2064 = vshrl.u32 %v2063, 4
        %v2065 = vmul.u32 %v2064, 24
        %v2066 = vsub.s32 %v2060, %v2065
        %v2067 = vsub.s32 0, %v2066
        %v2068 = vsel %vm2058, %v2067, %v2066
        %vm2069 = vcmp.lt.s32.totalorder %v1641, 0
        %v2070 = vsub.s32 0, %v1641
        %v2071 = vsel %vm2069, %v2070, %v1641
        %v2072 = vmul.u32.u64.compose %v2071, 2863311531
        %v2073 = vextract.low.u32 %v2072
        %v2074 = vextract.high.u32 %v2072
        %v2075 = vshrl.u32 %v2074, 4
        %v2076 = vmul.u32 %v2075, 24
        %v2077 = vsub.s32 %v2071, %v2076
        %v2078 = vsub.s32 0, %v2077
        %v2079 = vsel %vm2069, %v2078, %v2077
        %vm2080 = vcmp.lt.s32.totalorder %v1642, 0
        %v2081 = vsub.s32 0, %v1642
        %v2082 = vsel %vm2080, %v2081, %v1642
        %v2083 = vmul.u32.u64.compose %v2082, 2863311531
        %v2084 = vextract.low.u32 %v2083
        %v2085 = vextract.high.u32 %v2083
        %v2086 = vshrl.u32 %v2085, 4
        %v2087 = vmul.u32 %v2086, 24
        %v2088 = vsub.s32 %v2082, %v2087
        %v2089 = vsub.s32 0, %v2088
        %v2090 = vsel %vm2080, %v2089, %v2088
        %vm2091 = vcmp.lt.s32.totalorder %v1643, 0
        %v2092 = vsub.s32 0, %v1643
        %v2093 = vsel %vm2091, %v2092, %v1643
        %v2094 = vmul.u32.u64.compose %v2093, 2863311531
        %v2095 = vextract.low.u32 %v2094
        %v2096 = vextract.high.u32 %v2094
        %v2097 = vshrl.u32 %v2096, 4
        %v2098 = vmul.u32 %v2097, 24
        %v2099 = vsub.s32 %v2093, %v2098
        %v2100 = vsub.s32 0, %v2099
        %v2101 = vsel %vm2091, %v2100, %v2099
        %vm2102 = vcmp.lt.s32.totalorder %v1644, 0
        %v2103 = vsub.s32 0, %v1644
        %v2104 = vsel %vm2102, %v2103, %v1644
        %v2105 = vmul.u32.u64.compose %v2104, 2863311531
        %v2106 = vextract.low.u32 %v2105
        %v2107 = vextract.high.u32 %v2105
        %v2108 = vshrl.u32 %v2107, 4
        %v2109 = vmul.u32 %v2108, 24
        %v2110 = vsub.s32 %v2104, %v2109
        %v2111 = vsub.s32 0, %v2110
        %v2112 = vsel %vm2102, %v2111, %v2110
        %vm2113 = vcmp.lt.s32.totalorder %v1645, 0
        %v2114 = vsub.s32 0, %v1645
        %v2115 = vsel %vm2113, %v2114, %v1645
        %v2116 = vmul.u32.u64.compose %v2115, 2863311531
        %v2117 = vextract.low.u32 %v2116
        %v2118 = vextract.high.u32 %v2116
        %v2119 = vshrl.u32 %v2118, 4
        %v2120 = vmul.u32 %v2119, 24
        %v2121 = vsub.s32 %v2115, %v2120
        %v2122 = vsub.s32 0, %v2121
        %v2123 = vsel %vm2113, %v2122, %v2121
        %vm2124 = vcmp.lt.s32.totalorder %v1646, 0
        %v2125 = vsub.s32 0, %v1646
        %v2126 = vsel %vm2124, %v2125, %v1646
        %v2127 = vmul.u32.u64.compose %v2126, 2863311531
        %v2128 = vextract.low.u32 %v2127
        %v2129 = vextract.high.u32 %v2127
        %v2130 = vshrl.u32 %v2129, 4
        %v2131 = vmul.u32 %v2130, 24
        %v2132 = vsub.s32 %v2126, %v2131
        %v2133 = vsub.s32 0, %v2132
        %v2134 = vsel %vm2124, %v2133, %v2132
        %vm2135 = vcmp.lt.s32.totalorder %v1647, 0
        %v2136 = vsub.s32 0, %v1647
        %v2137 = vsel %vm2135, %v2136, %v1647
        %v2138 = vmul.u32.u64.compose %v2137, 2863311531
        %v2139 = vextract.low.u32 %v2138
        %v2140 = vextract.high.u32 %v2138
        %v2141 = vshrl.u32 %v2140, 4
        %v2142 = vmul.u32 %v2141, 24
        %v2143 = vsub.s32 %v2137, %v2142
        %v2144 = vsub.s32 0, %v2143
        %v2145 = vsel %vm2135, %v2144, %v2143
        %vm2146 = vcmp.lt.s32.totalorder %v1648, 0
        %v2147 = vsub.s32 0, %v1648
        %v2148 = vsel %vm2146, %v2147, %v1648
        %v2149 = vmul.u32.u64.compose %v2148, 2863311531
        %v2150 = vextract.low.u32 %v2149
        %v2151 = vextract.high.u32 %v2149
        %v2152 = vshrl.u32 %v2151, 4
        %v2153 = vmul.u32 %v2152, 24
        %v2154 = vsub.s32 %v2148, %v2153
        %v2155 = vsub.s32 0, %v2154
        %v2156 = vsel %vm2146, %v2155, %v2154
        %vm2157 = vcmp.lt.s32.totalorder %v1649, 0
        %v2158 = vsub.s32 0, %v1649
        %v2159 = vsel %vm2157, %v2158, %v1649
        %v2160 = vmul.u32.u64.compose %v2159, 2863311531
        %v2161 = vextract.low.u32 %v2160
        %v2162 = vextract.high.u32 %v2160
        %v2163 = vshrl.u32 %v2162, 4
        %v2164 = vmul.u32 %v2163, 24
        %v2165 = vsub.s32 %v2159, %v2164
        %v2166 = vsub.s32 0, %v2165
        %v2167 = vsel %vm2157, %v2166, %v2165
        %vm2168 = vcmp.lt.s32.totalorder %v1650, 0
        %v2169 = vsub.s32 0, %v1650
        %v2170 = vsel %vm2168, %v2169, %v1650
        %v2171 = vmul.u32.u64.compose %v2170, 2863311531
        %v2172 = vextract.low.u32 %v2171
        %v2173 = vextract.high.u32 %v2171
        %v2174 = vshrl.u32 %v2173, 4
        %v2175 = vmul.u32 %v2174, 24
        %v2176 = vsub.s32 %v2170, %v2175
        %v2177 = vsub.s32 0, %v2176
        %v2178 = vsel %vm2168, %v2177, %v2176
        %vm2179 = vcmp.ne.s32.totalorder %v1661, 0
        %vm2180 = vcmp.ne.s32.totalorder %v1672, 0
        %vm2181 = vcmp.ne.s32.totalorder %v1683, 0
        %vm2182 = vcmp.ne.s32.totalorder %v1694, 0
        %vm2183 = vcmp.ne.s32.totalorder %v1705, 0
        %vm2184 = vcmp.ne.s32.totalorder %v1716, 0
        %vm2185 = vcmp.ne.s32.totalorder %v1727, 0
        %vm2186 = vcmp.ne.s32.totalorder %v1738, 0
        %vm2187 = vcmp.ne.s32.totalorder %v1749, 0
        %vm2188 = vcmp.ne.s32.totalorder %v1760, 0
        %vm2189 = vcmp.ne.s32.totalorder %v1771, 0
        %vm2190 = vcmp.ne.s32.totalorder %v1782, 0
        %vm2191 = vcmp.ne.s32.totalorder %v1793, 0
        %vm2192 = vcmp.ne.s32.totalorder %v1804, 0
        %vm2193 = vcmp.ne.s32.totalorder %v1815, 0
        %vm2194 = vcmp.ne.s32.totalorder %v1826, 0
        %vm2195 = vcmp.ne.s32.totalorder %v1837, 0
        %vm2196 = vcmp.ne.s32.totalorder %v1848, 0
        %vm2197 = vcmp.ne.s32.totalorder %v1859, 0
        %vm2198 = vcmp.ne.s32.totalorder %v1870, 0
        %vm2199 = vcmp.ne.s32.totalorder %v1881, 0
        %vm2200 = vcmp.ne.s32.totalorder %v1892, 0
        %vm2201 = vcmp.ne.s32.totalorder %v1903, 0
        %vm2202 = vcmp.ne.s32.totalorder %v1914, 0
        %vm2203 = vcmp.ne.s32.totalorder %v1925, 0
        %vm2204 = vcmp.ne.s32.totalorder %v1936, 0
        %vm2205 = vcmp.ne.s32.totalorder %v1947, 0
        %vm2206 = vcmp.ne.s32.totalorder %v1958, 0
        %vm2207 = vcmp.ne.s32.totalorder %v1969, 0
        %vm2208 = vcmp.ne.s32.totalorder %v1980, 0
        %vm2209 = vcmp.ne.s32.totalorder %v1991, 0
        %vm2210 = vcmp.ne.s32.totalorder %v2002, 0
        %vm2211 = vcmp.ne.s32.totalorder %v2013, 0
        %vm2212 = vcmp.ne.s32.totalorder %v2024, 0
        %vm2213 = vcmp.ne.s32.totalorder %v2035, 0
        %vm2214 = vcmp.ne.s32.totalorder %v2046, 0
        %vm2215 = vcmp.ne.s32.totalorder %v2057, 0
        %vm2216 = vcmp.ne.s32.totalorder %v2068, 0
        %vm2217 = vcmp.ne.s32.totalorder %v2079, 0
        %vm2218 = vcmp.ne.s32.totalorder %v2090, 0
        %vm2219 = vcmp.ne.s32.totalorder %v2101, 0
        %vm2220 = vcmp.ne.s32.totalorder %v2112, 0
        %vm2221 = vcmp.ne.s32.totalorder %v2123, 0
        %vm2222 = vcmp.ne.s32.totalorder %v2134, 0
        %vm2223 = vcmp.ne.s32.totalorder %v2145, 0
        %vm2224 = vcmp.ne.s32.totalorder %v2156, 0
        %vm2225 = vcmp.ne.s32.totalorder %v2167, 0
        %vm2226 = vcmp.ne.s32.totalorder %v2178, 0
        %vm2227 = vcmp.lt.s32.totalorder %v1661, 0
        %vm2228 = vcmp.lt.s32.totalorder %v1672, 0
        %vm2229 = vcmp.lt.s32.totalorder %v1683, 0
        %vm2230 = vcmp.lt.s32.totalorder %v1694, 0
        %vm2231 = vcmp.lt.s32.totalorder %v1705, 0
        %vm2232 = vcmp.lt.s32.totalorder %v1716, 0
        %vm2233 = vcmp.lt.s32.totalorder %v1727, 0
        %vm2234 = vcmp.lt.s32.totalorder %v1738, 0
        %vm2235 = vcmp.lt.s32.totalorder %v1749, 0
        %vm2236 = vcmp.lt.s32.totalorder %v1760, 0
        %vm2237 = vcmp.lt.s32.totalorder %v1771, 0
        %vm2238 = vcmp.lt.s32.totalorder %v1782, 0
        %vm2239 = vcmp.lt.s32.totalorder %v1793, 0
        %vm2240 = vcmp.lt.s32.totalorder %v1804, 0
        %vm2241 = vcmp.lt.s32.totalorder %v1815, 0
        %vm2242 = vcmp.lt.s32.totalorder %v1826, 0
        %vm2243 = vcmp.lt.s32.totalorder %v1837, 0
        %vm2244 = vcmp.lt.s32.totalorder %v1848, 0
        %vm2245 = vcmp.lt.s32.totalorder %v1859, 0
        %vm2246 = vcmp.lt.s32.totalorder %v1870, 0
        %vm2247 = vcmp.lt.s32.totalorder %v1881, 0
        %vm2248 = vcmp.lt.s32.totalorder %v1892, 0
        %vm2249 = vcmp.lt.s32.totalorder %v1903, 0
        %vm2250 = vcmp.lt.s32.totalorder %v1914, 0
        %vm2251 = vcmp.lt.s32.totalorder %v1925, 0
        %vm2252 = vcmp.lt.s32.totalorder %v1936, 0
        %vm2253 = vcmp.lt.s32.totalorder %v1947, 0
        %vm2254 = vcmp.lt.s32.totalorder %v1958, 0
        %vm2255 = vcmp.lt.s32.totalorder %v1969, 0
        %vm2256 = vcmp.lt.s32.totalorder %v1980, 0
        %vm2257 = vcmp.lt.s32.totalorder %v1991, 0
        %vm2258 = vcmp.lt.s32.totalorder %v2002, 0
        %vm2259 = vcmp.lt.s32.totalorder %v2013, 0
        %vm2260 = vcmp.lt.s32.totalorder %v2024, 0
        %vm2261 = vcmp.lt.s32.totalorder %v2035, 0
        %vm2262 = vcmp.lt.s32.totalorder %v2046, 0
        %vm2263 = vcmp.lt.s32.totalorder %v2057, 0
        %vm2264 = vcmp.lt.s32.totalorder %v2068, 0
        %vm2265 = vcmp.lt.s32.totalorder %v2079, 0
        %vm2266 = vcmp.lt.s32.totalorder %v2090, 0
        %vm2267 = vcmp.lt.s32.totalorder %v2101, 0
        %vm2268 = vcmp.lt.s32.totalorder %v2112, 0
        %vm2269 = vcmp.lt.s32.totalorder %v2123, 0
        %vm2270 = vcmp.lt.s32.totalorder %v2134, 0
        %vm2271 = vcmp.lt.s32.totalorder %v2145, 0
        %vm2272 = vcmp.lt.s32.totalorder %v2156, 0
        %vm2273 = vcmp.lt.s32.totalorder %v2167, 0
        %vm2274 = vcmp.lt.s32.totalorder %v2178, 0
        %vm2275 = vmand %vm2227, %vm2179
        %vm2276 = vmand %vm2228, %vm2180
        %vm2277 = vmand %vm2229, %vm2181
        %vm2278 = vmand %vm2230, %vm2182
        %vm2279 = vmand %vm2231, %vm2183
        %vm2280 = vmand %vm2232, %vm2184
        %vm2281 = vmand %vm2233, %vm2185
        %vm2282 = vmand %vm2234, %vm2186
        %vm2283 = vmand %vm2235, %vm2187
        %vm2284 = vmand %vm2236, %vm2188
        %vm2285 = vmand %vm2237, %vm2189
        %vm2286 = vmand %vm2238, %vm2190
        %vm2287 = vmand %vm2239, %vm2191
        %vm2288 = vmand %vm2240, %vm2192
        %vm2289 = vmand %vm2241, %vm2193
        %vm2290 = vmand %vm2242, %vm2194
        %vm2291 = vmand %vm2243, %vm2195
        %vm2292 = vmand %vm2244, %vm2196
        %vm2293 = vmand %vm2245, %vm2197
        %vm2294 = vmand %vm2246, %vm2198
        %vm2295 = vmand %vm2247, %vm2199
        %vm2296 = vmand %vm2248, %vm2200
        %vm2297 = vmand %vm2249, %vm2201
        %vm2298 = vmand %vm2250, %vm2202
        %vm2299 = vmand %vm2251, %vm2203
        %vm2300 = vmand %vm2252, %vm2204
        %vm2301 = vmand %vm2253, %vm2205
        %vm2302 = vmand %vm2254, %vm2206
        %vm2303 = vmand %vm2255, %vm2207
        %vm2304 = vmand %vm2256, %vm2208
        %vm2305 = vmand %vm2257, %vm2209
        %vm2306 = vmand %vm2258, %vm2210
        %vm2307 = vmand %vm2259, %vm2211
        %vm2308 = vmand %vm2260, %vm2212
        %vm2309 = vmand %vm2261, %vm2213
        %vm2310 = vmand %vm2262, %vm2214
        %vm2311 = vmand %vm2263, %vm2215
        %vm2312 = vmand %vm2264, %vm2216
        %vm2313 = vmand %vm2265, %vm2217
        %vm2314 = vmand %vm2266, %vm2218
        %vm2315 = vmand %vm2267, %vm2219
        %vm2316 = vmand %vm2268, %vm2220
        %vm2317 = vmand %vm2269, %vm2221
        %vm2318 = vmand %vm2270, %vm2222
        %vm2319 = vmand %vm2271, %vm2223
        %vm2320 = vmand %vm2272, %vm2224
        %vm2321 = vmand %vm2273, %vm2225
        %vm2322 = vmand %vm2274, %vm2226
        %v2323 = vadd.s32 %v1661, 24
        %v2324 = vadd.s32 %v1672, 24
        %v2325 = vadd.s32 %v1683, 24
        %v2326 = vadd.s32 %v1694, 24
        %v2327 = vadd.s32 %v1705, 24
        %v2328 = vadd.s32 %v1716, 24
        %v2329 = vadd.s32 %v1727, 24
        %v2330 = vadd.s32 %v1738, 24
        %v2331 = vadd.s32 %v1749, 24
        %v2332 = vadd.s32 %v1760, 24
        %v2333 = vadd.s32 %v1771, 24
        %v2334 = vadd.s32 %v1782, 24
        %v2335 = vadd.s32 %v1793, 24
        %v2336 = vadd.s32 %v1804, 24
        %v2337 = vadd.s32 %v1815, 24
        %v2338 = vadd.s32 %v1826, 24
        %v2339 = vadd.s32 %v1837, 24
        %v2340 = vadd.s32 %v1848, 24
        %v2341 = vadd.s32 %v1859, 24
        %v2342 = vadd.s32 %v1870, 24
        %v2343 = vadd.s32 %v1881, 24
        %v2344 = vadd.s32 %v1892, 24
        %v2345 = vadd.s32 %v1903, 24
        %v2346 = vadd.s32 %v1914, 24
        %v2347 = vadd.s32 %v1925, 24
        %v2348 = vadd.s32 %v1936, 24
        %v2349 = vadd.s32 %v1947, 24
        %v2350 = vadd.s32 %v1958, 24
        %v2351 = vadd.s32 %v1969, 24
        %v2352 = vadd.s32 %v1980, 24
        %v2353 = vadd.s32 %v1991, 24
        %v2354 = vadd.s32 %v2002, 24
        %v2355 = vadd.s32 %v2013, 24
        %v2356 = vadd.s32 %v2024, 24
        %v2357 = vadd.s32 %v2035, 24
        %v2358 = vadd.s32 %v2046, 24
        %v2359 = vadd.s32 %v2057, 24
        %v2360 = vadd.s32 %v2068, 24
        %v2361 = vadd.s32 %v2079, 24
        %v2362 = vadd.s32 %v2090, 24
        %v2363 = vadd.s32 %v2101, 24
        %v2364 = vadd.s32 %v2112, 24
        %v2365 = vadd.s32 %v2123, 24
        %v2366 = vadd.s32 %v2134, 24
        %v2367 = vadd.s32 %v2145, 24
        %v2368 = vadd.s32 %v2156, 24
        %v2369 = vadd.s32 %v2167, 24
        %v2370 = vadd.s32 %v2178, 24
        %v2371 = vsel %vm2275, %v2323, %v1661
        %v2372 = vsel %vm2276, %v2324, %v1672
        %v2373 = vsel %vm2277, %v2325, %v1683
        %v2374 = vsel %vm2278, %v2326, %v1694
        %v2375 = vsel %vm2279, %v2327, %v1705
        %v2376 = vsel %vm2280, %v2328, %v1716
        %v2377 = vsel %vm2281, %v2329, %v1727
        %v2378 = vsel %vm2282, %v2330, %v1738
        %v2379 = vsel %vm2283, %v2331, %v1749
        %v2380 = vsel %vm2284, %v2332, %v1760
        %v2381 = vsel %vm2285, %v2333, %v1771
        %v2382 = vsel %vm2286, %v2334, %v1782
        %v2383 = vsel %vm2287, %v2335, %v1793
        %v2384 = vsel %vm2288, %v2336, %v1804
        %v2385 = vsel %vm2289, %v2337, %v1815
        %v2386 = vsel %vm2290, %v2338, %v1826
        %v2387 = vsel %vm2291, %v2339, %v1837
        %v2388 = vsel %vm2292, %v2340, %v1848
        %v2389 = vsel %vm2293, %v2341, %v1859
        %v2390 = vsel %vm2294, %v2342, %v1870
        %v2391 = vsel %vm2295, %v2343, %v1881
        %v2392 = vsel %vm2296, %v2344, %v1892
        %v2393 = vsel %vm2297, %v2345, %v1903
        %v2394 = vsel %vm2298, %v2346, %v1914
        %v2395 = vsel %vm2299, %v2347, %v1925
        %v2396 = vsel %vm2300, %v2348, %v1936
        %v2397 = vsel %vm2301, %v2349, %v1947
        %v2398 = vsel %vm2302, %v2350, %v1958
        %v2399 = vsel %vm2303, %v2351, %v1969
        %v2400 = vsel %vm2304, %v2352, %v1980
        %v2401 = vsel %vm2305, %v2353, %v1991
        %v2402 = vsel %vm2306, %v2354, %v2002
        %v2403 = vsel %vm2307, %v2355, %v2013
        %v2404 = vsel %vm2308, %v2356, %v2024
        %v2405 = vsel %vm2309, %v2357, %v2035
        %v2406 = vsel %vm2310, %v2358, %v2046
        %v2407 = vsel %vm2311, %v2359, %v2057
        %v2408 = vsel %vm2312, %v2360, %v2068
        %v2409 = vsel %vm2313, %v2361, %v2079
        %v2410 = vsel %vm2314, %v2362, %v2090
        %v2411 = vsel %vm2315, %v2363, %v2101
        %v2412 = vsel %vm2316, %v2364, %v2112
        %v2413 = vsel %vm2317, %v2365, %v2123
        %v2414 = vsel %vm2318, %v2366, %v2134
        %v2415 = vsel %vm2319, %v2367, %v2145
        %v2416 = vsel %vm2320, %v2368, %v2156
        %v2417 = vsel %vm2321, %v2369, %v2167
        %v2418 = vsel %vm2322, %v2370, %v2178
        %vm2419 = vcmp.lt.s32.totalorder %v2371, 16
        %vm2420 = vcmp.lt.s32.totalorder %v2372, 16
        %vm2421 = vcmp.lt.s32.totalorder %v2373, 16
        %vm2422 = vcmp.lt.s32.totalorder %v2374, 16
        %vm2423 = vcmp.lt.s32.totalorder %v2375, 16
        %vm2424 = vcmp.lt.s32.totalorder %v2376, 16
        %vm2425 = vcmp.lt.s32.totalorder %v2377, 16
        %vm2426 = vcmp.lt.s32.totalorder %v2378, 16
        %vm2427 = vcmp.lt.s32.totalorder %v2379, 16
        %vm2428 = vcmp.lt.s32.totalorder %v2380, 16
        %vm2429 = vcmp.lt.s32.totalorder %v2381, 16
        %vm2430 = vcmp.lt.s32.totalorder %v2382, 16
        %vm2431 = vcmp.lt.s32.totalorder %v2383, 16
        %vm2432 = vcmp.lt.s32.totalorder %v2384, 16
        %vm2433 = vcmp.lt.s32.totalorder %v2385, 16
        %vm2434 = vcmp.lt.s32.totalorder %v2386, 16
        %vm2435 = vcmp.lt.s32.totalorder %v2387, 16
        %vm2436 = vcmp.lt.s32.totalorder %v2388, 16
        %vm2437 = vcmp.lt.s32.totalorder %v2389, 16
        %vm2438 = vcmp.lt.s32.totalorder %v2390, 16
        %vm2439 = vcmp.lt.s32.totalorder %v2391, 16
        %vm2440 = vcmp.lt.s32.totalorder %v2392, 16
        %vm2441 = vcmp.lt.s32.totalorder %v2393, 16
        %vm2442 = vcmp.lt.s32.totalorder %v2394, 16
        %vm2443 = vcmp.lt.s32.totalorder %v2395, 16
        %vm2444 = vcmp.lt.s32.totalorder %v2396, 16
        %vm2445 = vcmp.lt.s32.totalorder %v2397, 16
        %vm2446 = vcmp.lt.s32.totalorder %v2398, 16
        %vm2447 = vcmp.lt.s32.totalorder %v2399, 16
        %vm2448 = vcmp.lt.s32.totalorder %v2400, 16
        %vm2449 = vcmp.lt.s32.totalorder %v2401, 16
        %vm2450 = vcmp.lt.s32.totalorder %v2402, 16
        %vm2451 = vcmp.lt.s32.totalorder %v2403, 16
        %vm2452 = vcmp.lt.s32.totalorder %v2404, 16
        %vm2453 = vcmp.lt.s32.totalorder %v2405, 16
        %vm2454 = vcmp.lt.s32.totalorder %v2406, 16
        %vm2455 = vcmp.lt.s32.totalorder %v2407, 16
        %vm2456 = vcmp.lt.s32.totalorder %v2408, 16
        %vm2457 = vcmp.lt.s32.totalorder %v2409, 16
        %vm2458 = vcmp.lt.s32.totalorder %v2410, 16
        %vm2459 = vcmp.lt.s32.totalorder %v2411, 16
        %vm2460 = vcmp.lt.s32.totalorder %v2412, 16
        %vm2461 = vcmp.lt.s32.totalorder %v2413, 16
        %vm2462 = vcmp.lt.s32.totalorder %v2414, 16
        %vm2463 = vcmp.lt.s32.totalorder %v2415, 16
        %vm2464 = vcmp.lt.s32.totalorder %v2416, 16
        %vm2465 = vcmp.lt.s32.totalorder %v2417, 16
        %vm2466 = vcmp.lt.s32.totalorder %v2418, 16
        %v2467 = vsel %vm2419, 0.00390625, 0.0
        %v2468 = vsel %vm2420, 0.00390625, 0.0
        %v2469 = vsel %vm2421, 0.00390625, 0.0
        %v2470 = vsel %vm2422, 0.00390625, 0.0
        %v2471 = vsel %vm2423, 0.00390625, 0.0
        %v2472 = vsel %vm2424, 0.00390625, 0.0
        %v2473 = vsel %vm2425, 0.00390625, 0.0
        %v2474 = vsel %vm2426, 0.00390625, 0.0
        %v2475 = vsel %vm2427, 0.00390625, 0.0
        %v2476 = vsel %vm2428, 0.00390625, 0.0
        %v2477 = vsel %vm2429, 0.00390625, 0.0
        %v2478 = vsel %vm2430, 0.00390625, 0.0
        %v2479 = vsel %vm2431, 0.00390625, 0.0
        %v2480 = vsel %vm2432, 0.00390625, 0.0
        %v2481 = vsel %vm2433, 0.00390625, 0.0
        %v2482 = vsel %vm2434, 0.00390625, 0.0
        %v2483 = vsel %vm2435, 0.00390625, 0.0
        %v2484 = vsel %vm2436, 0.00390625, 0.0
        %v2485 = vsel %vm2437, 0.00390625, 0.0
        %v2486 = vsel %vm2438, 0.00390625, 0.0
        %v2487 = vsel %vm2439, 0.00390625, 0.0
        %v2488 = vsel %vm2440, 0.00390625, 0.0
        %v2489 = vsel %vm2441, 0.00390625, 0.0
        %v2490 = vsel %vm2442, 0.00390625, 0.0
        %v2491 = vsel %vm2443, 0.00390625, 0.0
        %v2492 = vsel %vm2444, 0.00390625, 0.0
        %v2493 = vsel %vm2445, 0.00390625, 0.0
        %v2494 = vsel %vm2446, 0.00390625, 0.0
        %v2495 = vsel %vm2447, 0.00390625, 0.0
        %v2496 = vsel %vm2448, 0.00390625, 0.0
        %v2497 = vsel %vm2449, 0.00390625, 0.0
        %v2498 = vsel %vm2450, 0.00390625, 0.0
        %v2499 = vsel %vm2451, 0.00390625, 0.0
        %v2500 = vsel %vm2452, 0.00390625, 0.0
        %v2501 = vsel %vm2453, 0.00390625, 0.0
        %v2502 = vsel %vm2454, 0.00390625, 0.0
        %v2503 = vsel %vm2455, 0.00390625, 0.0
        %v2504 = vsel %vm2456, 0.00390625, 0.0
        %v2505 = vsel %vm2457, 0.00390625, 0.0
        %v2506 = vsel %vm2458, 0.00390625, 0.0
        %v2507 = vsel %vm2459, 0.00390625, 0.0
        %v2508 = vsel %vm2460, 0.00390625, 0.0
        %v2509 = vsel %vm2461, 0.00390625, 0.0
        %v2510 = vsel %vm2462, 0.00390625, 0.0
        %v2511 = vsel %vm2463, 0.00390625, 0.0
        %v2512 = vsel %vm2464, 0.00390625, 0.0
        %v2513 = vsel %vm2465, 0.00390625, 0.0
        %v2514 = vsel %vm2466, 0.00390625, 0.0
        %v2515 = vmul.f32 %v1553, %v2467
        %v2516 = vmul.f32 %v1554, %v2468
        %v2517 = vmul.f32 %v1555, %v2469
        %v2518 = vmul.f32 %v1556, %v2470
        %v2519 = vmul.f32 %v1557, %v2471
        %v2520 = vmul.f32 %v1558, %v2472
        %v2521 = vmul.f32 %v1559, %v2473
        %v2522 = vmul.f32 %v1560, %v2474
        %v2523 = vmul.f32 %v1561, %v2475
        %v2524 = vmul.f32 %v1562, %v2476
        %v2525 = vmul.f32 %v1563, %v2477
        %v2526 = vmul.f32 %v1564, %v2478
        %v2527 = vmul.f32 %v1565, %v2479
        %v2528 = vmul.f32 %v1566, %v2480
        %v2529 = vmul.f32 %v1567, %v2481
        %v2530 = vmul.f32 %v1568, %v2482
        %v2531 = vmul.f32 %v1569, %v2483
        %v2532 = vmul.f32 %v1570, %v2484
        %v2533 = vmul.f32 %v1571, %v2485
        %v2534 = vmul.f32 %v1572, %v2486
        %v2535 = vmul.f32 %v1573, %v2487
        %v2536 = vmul.f32 %v1574, %v2488
        %v2537 = vmul.f32 %v1575, %v2489
        %v2538 = vmul.f32 %v1576, %v2490
        %v2539 = vmul.f32 %v1577, %v2491
        %v2540 = vmul.f32 %v1578, %v2492
        %v2541 = vmul.f32 %v1579, %v2493
        %v2542 = vmul.f32 %v1580, %v2494
        %v2543 = vmul.f32 %v1581, %v2495
        %v2544 = vmul.f32 %v1582, %v2496
        %v2545 = vmul.f32 %v1583, %v2497
        %v2546 = vmul.f32 %v1584, %v2498
        %v2547 = vmul.f32 %v1585, %v2499
        %v2548 = vmul.f32 %v1586, %v2500
        %v2549 = vmul.f32 %v1587, %v2501
        %v2550 = vmul.f32 %v1588, %v2502
        %v2551 = vmul.f32 %v1589, %v2503
        %v2552 = vmul.f32 %v1590, %v2504
        %v2553 = vmul.f32 %v1591, %v2505
        %v2554 = vmul.f32 %v1592, %v2506
        %v2555 = vmul.f32 %v1593, %v2507
        %v2556 = vmul.f32 %v1594, %v2508
        %v2557 = vmul.f32 %v1595, %v2509
        %v2558 = vmul.f32 %v1596, %v2510
        %v2559 = vmul.f32 %v1597, %v2511
        %v2560 = vmul.f32 %v1598, %v2512
        %v2561 = vmul.f32 %v1599, %v2513
        %v2562 = vmul.f32 %v1600, %v2514
        %v2563 = vadd.f32 %v2515, %v2516
        %v2564 = vadd.f32 %v2563, %v2517
        %v2565 = vadd.f32 %v2564, %v2518
        %v2566 = vadd.f32 %v2565, %v2519
        %v2567 = vadd.f32 %v2566, %v2520
        %v2568 = vadd.f32 %v2567, %v2521
        %v2569 = vadd.f32 %v2568, %v2522
        %v2570 = vadd.f32 %v2569, %v2523
        %v2571 = vadd.f32 %v2570, %v2524
        %v2572 = vadd.f32 %v2571, %v2525
        %v2573 = vadd.f32 %v2572, %v2526
        %v2574 = vadd.f32 %v2573, %v2527
        %v2575 = vadd.f32 %v2574, %v2528
        %v2576 = vadd.f32 %v2575, %v2529
        %v2577 = vadd.f32 %v2576, %v2530
        %v2578 = vadd.f32 %v2577, %v2531
        %v2579 = vadd.f32 %v2578, %v2532
        %v2580 = vadd.f32 %v2579, %v2533
        %v2581 = vadd.f32 %v2580, %v2534
        %v2582 = vadd.f32 %v2581, %v2535
        %v2583 = vadd.f32 %v2582, %v2536
        %v2584 = vadd.f32 %v2583, %v2537
        %v2585 = vadd.f32 %v2584, %v2538
        %v2586 = vadd.f32 %v2585, %v2539
        %v2587 = vadd.f32 %v2586, %v2540
        %v2588 = vadd.f32 %v2587, %v2541
        %v2589 = vadd.f32 %v2588, %v2542
        %v2590 = vadd.f32 %v2589, %v2543
        %v2591 = vadd.f32 %v2590, %v2544
        %v2592 = vadd.f32 %v2591, %v2545
        %v2593 = vadd.f32 %v2592, %v2546
        %v2594 = vadd.f32 %v2593, %v2547
        %v2595 = vadd.f32 %v2594, %v2548
        %v2596 = vadd.f32 %v2595, %v2549
        %v2597 = vadd.f32 %v2596, %v2550
        %v2598 = vadd.f32 %v2597, %v2551
        %v2599 = vadd.f32 %v2598, %v2552
        %v2600 = vadd.f32 %v2599, %v2553
        %v2601 = vadd.f32 %v2600, %v2554
        %v2602 = vadd.f32 %v2601, %v2555
        %v2603 = vadd.f32 %v2602, %v2556
        %v2604 = vadd.f32 %v2603, %v2557
        %v2605 = vadd.f32 %v2604, %v2558
        %v2606 = vadd.f32 %v2605, %v2559
        %v2607 = vadd.f32 %v2606, %v2560
        %v2608 = vadd.f32 %v2607, %v2561
        %v2609 = vadd.f32 %v2608, %v2562
        %v2610 = vrot.slane %v2609, 4
        %v2611 = vadd.f32 %v2609, %v2610
        %v2612 = vrot.slane %v2611, 2
        %v2613 = vadd.f32 %v2611, %v2612
        %v2614 = vrot.slane %v2613, 1
        %v2615 = vadd.f32 %v2613, %v2614
        %v2616 = vadd.f32 %v2615, %v1601
        %v2617 = vand.u32 2147483647, %v2616
        %v2618 = vmul.f32 %v2617, %v1601
        %v2619 = vld [vmem:[%s4] sm:$0x1]
        %v2620 = vadd.f32 %v2618, %v2619
        %v2621 = vlaneseq
        %v2622 = vshrl.u32 %v2621, 7
        %v2623 = vsub.s32 0, %v2622
        %v2624 = vrot.slane %v2617, %v2623
        %v2625 = vmul.f32 %v1553, %v2624
        %v2626 = vmul.f32 %v1554, %v2624
        %v2627 = vmul.f32 %v1555, %v2624
        %v2628 = vmul.f32 %v1556, %v2624
        %v2629 = vmul.f32 %v1557, %v2624
        %v2630 = vmul.f32 %v1558, %v2624
        %v2631 = vmul.f32 %v1559, %v2624
        %v2632 = vmul.f32 %v1560, %v2624
        %v2633 = vmul.f32 %v1561, %v2624
        %v2634 = vmul.f32 %v1562, %v2624
        %v2635 = vmul.f32 %v1563, %v2624
        %v2636 = vmul.f32 %v1564, %v2624
        %v2637 = vmul.f32 %v1565, %v2624
        %v2638 = vmul.f32 %v1566, %v2624
        %v2639 = vmul.f32 %v1567, %v2624
        %v2640 = vmul.f32 %v1568, %v2624
        %v2641 = vmul.f32 %v1569, %v2624
        %v2642 = vmul.f32 %v1570, %v2624
        %v2643 = vmul.f32 %v1571, %v2624
        %v2644 = vmul.f32 %v1572, %v2624
        %v2645 = vmul.f32 %v1573, %v2624
        %v2646 = vmul.f32 %v1574, %v2624
        %v2647 = vmul.f32 %v1575, %v2624
        %v2648 = vmul.f32 %v1576, %v2624
        %v2649 = vmul.f32 %v1577, %v2624
        %v2650 = vmul.f32 %v1578, %v2624
        %v2651 = vmul.f32 %v1579, %v2624
        %v2652 = vmul.f32 %v1580, %v2624
        %v2653 = vmul.f32 %v1581, %v2624
        %v2654 = vmul.f32 %v1582, %v2624
        %v2655 = vmul.f32 %v1583, %v2624
        %v2656 = vmul.f32 %v1584, %v2624
        %v2657 = vmul.f32 %v1585, %v2624
        %v2658 = vmul.f32 %v1586, %v2624
        %v2659 = vmul.f32 %v1587, %v2624
        %v2660 = vmul.f32 %v1588, %v2624
        %v2661 = vmul.f32 %v1589, %v2624
        %v2662 = vmul.f32 %v1590, %v2624
        %v2663 = vmul.f32 %v1591, %v2624
        %v2664 = vmul.f32 %v1592, %v2624
        %v2665 = vmul.f32 %v1593, %v2624
        %v2666 = vmul.f32 %v1594, %v2624
        %v2667 = vmul.f32 %v1595, %v2624
        %v2668 = vmul.f32 %v1596, %v2624
        %v2669 = vmul.f32 %v1597, %v2624
        %v2670 = vmul.f32 %v1598, %v2624
        %v2671 = vmul.f32 %v1599, %v2624
        %v2672 = vmul.f32 %v1600, %v2624
        %v2673 = vlaneseq
        %v2674 = vshrl.u32 %v2673, 7
        %v2675 = vsub.s32 0, %v2674
        %v2676 = vrot.slane %v2620, %v2675
        %v2677 = vadd.f32 %v2625, %v2676
        %v2678 = vadd.f32 %v2626, %v2676
        %v2679 = vadd.f32 %v2627, %v2676
        %v2680 = vadd.f32 %v2628, %v2676
        %v2681 = vadd.f32 %v2629, %v2676
        %v2682 = vadd.f32 %v2630, %v2676
        %v2683 = vadd.f32 %v2631, %v2676
        %v2684 = vadd.f32 %v2632, %v2676
        %v2685 = vadd.f32 %v2633, %v2676
        %v2686 = vadd.f32 %v2634, %v2676
        %v2687 = vadd.f32 %v2635, %v2676
        %v2688 = vadd.f32 %v2636, %v2676
        %v2689 = vadd.f32 %v2637, %v2676
        %v2690 = vadd.f32 %v2638, %v2676
        %v2691 = vadd.f32 %v2639, %v2676
        %v2692 = vadd.f32 %v2640, %v2676
        %v2693 = vadd.f32 %v2641, %v2676
        %v2694 = vadd.f32 %v2642, %v2676
        %v2695 = vadd.f32 %v2643, %v2676
        %v2696 = vadd.f32 %v2644, %v2676
        %v2697 = vadd.f32 %v2645, %v2676
        %v2698 = vadd.f32 %v2646, %v2676
        %v2699 = vadd.f32 %v2647, %v2676
        %v2700 = vadd.f32 %v2648, %v2676
        %v2701 = vadd.f32 %v2649, %v2676
        %v2702 = vadd.f32 %v2650, %v2676
        %v2703 = vadd.f32 %v2651, %v2676
        %v2704 = vadd.f32 %v2652, %v2676
        %v2705 = vadd.f32 %v2653, %v2676
        %v2706 = vadd.f32 %v2654, %v2676
        %v2707 = vadd.f32 %v2655, %v2676
        %v2708 = vadd.f32 %v2656, %v2676
        %v2709 = vadd.f32 %v2657, %v2676
        %v2710 = vadd.f32 %v2658, %v2676
        %v2711 = vadd.f32 %v2659, %v2676
        %v2712 = vadd.f32 %v2660, %v2676
        %v2713 = vadd.f32 %v2661, %v2676
        %v2714 = vadd.f32 %v2662, %v2676
        %v2715 = vadd.f32 %v2663, %v2676
        %v2716 = vadd.f32 %v2664, %v2676
        %v2717 = vadd.f32 %v2665, %v2676
        %v2718 = vadd.f32 %v2666, %v2676
        %v2719 = vadd.f32 %v2667, %v2676
        %v2720 = vadd.f32 %v2668, %v2676
        %v2721 = vadd.f32 %v2669, %v2676
        %v2722 = vadd.f32 %v2670, %v2676
        %v2723 = vadd.f32 %v2671, %v2676
        %v2724 = vadd.f32 %v2672, %v2676
        %2725 = vst [vmem:[%s217] sm:$0xff] %v2677
        %2726 = vst [vmem:[%s217 + $0x8] sm:$0xff] %v2678
        %2727 = vst [vmem:[%s217 + $0x10] sm:$0xff] %v2679
        %2728 = vst [vmem:[%s217 + $0x18] sm:$0xff] %v2680
        %2729 = vst [vmem:[%s217 + $0x20] sm:$0xff] %v2681
        %2730 = vst [vmem:[%s217 + $0x28] sm:$0xff] %v2682
        %2731 = vst [vmem:[%s217 + $0x30] sm:$0xff] %v2683
        %2732 = vst [vmem:[%s217 + $0x38] sm:$0xff] %v2684
        %2733 = vst [vmem:[%s217 + $0x40] sm:$0xff] %v2685
        %2734 = vst [vmem:[%s217 + $0x48] sm:$0xff] %v2686
        %2735 = vst [vmem:[%s217 + $0x50] sm:$0xff] %v2687
        %2736 = vst [vmem:[%s217 + $0x58] sm:$0xff] %v2688
        %2737 = vst [vmem:[%s217 + $0x60] sm:$0xff] %v2689
        %2738 = vst [vmem:[%s217 + $0x68] sm:$0xff] %v2690
        %2739 = vst [vmem:[%s217 + $0x70] sm:$0xff] %v2691
        %2740 = vst [vmem:[%s217 + $0x78] sm:$0xff] %v2692
        %2741 = vst [vmem:[%s217 + $0x80] sm:$0xff] %v2693
        %2742 = vst [vmem:[%s217 + $0x88] sm:$0xff] %v2694
        %2743 = vst [vmem:[%s217 + $0x90] sm:$0xff] %v2695
        %2744 = vst [vmem:[%s217 + $0x98] sm:$0xff] %v2696
        %2745 = vst [vmem:[%s217 + $0xa0] sm:$0xff] %v2697
        %2746 = vst [vmem:[%s217 + $0xa8] sm:$0xff] %v2698
        %2747 = vst [vmem:[%s217 + $0xb0] sm:$0xff] %v2699
        %2748 = vst [vmem:[%s217 + $0xb8] sm:$0xff] %v2700
        %2749 = vst [vmem:[%s217 + $0xc0] sm:$0xff] %v2701
        %2750 = vst [vmem:[%s217 + $0xc8] sm:$0xff] %v2702
        %2751 = vst [vmem:[%s217 + $0xd0] sm:$0xff] %v2703
        %2752 = vst [vmem:[%s217 + $0xd8] sm:$0xff] %v2704
        %2753 = vst [vmem:[%s217 + $0xe0] sm:$0xff] %v2705
        %2754 = vst [vmem:[%s217 + $0xe8] sm:$0xff] %v2706
        %2755 = vst [vmem:[%s217 + $0xf0] sm:$0xff] %v2707
        %2756 = vst [vmem:[%s217 + $0xf8] sm:$0xff] %v2708
        %2757 = vst [vmem:[%s217 + $0x100] sm:$0xff] %v2709
        %2758 = vst [vmem:[%s217 + $0x108] sm:$0xff] %v2710
        %2759 = vst [vmem:[%s217 + $0x110] sm:$0xff] %v2711
        %2760 = vst [vmem:[%s217 + $0x118] sm:$0xff] %v2712
        %2761 = vst [vmem:[%s217 + $0x120] sm:$0xff] %v2713
        %2762 = vst [vmem:[%s217 + $0x128] sm:$0xff] %v2714
        %2763 = vst [vmem:[%s217 + $0x130] sm:$0xff] %v2715
        %2764 = vst [vmem:[%s217 + $0x138] sm:$0xff] %v2716
        %2765 = vst [vmem:[%s217 + $0x140] sm:$0xff] %v2717
        %2766 = vst [vmem:[%s217 + $0x148] sm:$0xff] %v2718
        %2767 = vst [vmem:[%s217 + $0x150] sm:$0xff] %v2719
        %2768 = vst [vmem:[%s217 + $0x158] sm:$0xff] %v2720
        %2769 = vst [vmem:[%s217 + $0x160] sm:$0xff] %v2721
        %2770 = vst [vmem:[%s217 + $0x168] sm:$0xff] %v2722
        %2771 = vst [vmem:[%s217 + $0x170] sm:$0xff] %v2723
        %2772 = vst [vmem:[%s217 + $0x178] sm:$0xff] %v2724
        %s2773 = sand.u32 %s137, 1
        %s2774 = scalar_lea.sflag [#allocation3], %s2773
        %s2775 = sand.u32 %s137, 1
        %s2776 = smul.addr %s2775, 384
        %s2777 = scalar_lea.vmem [#allocation2], %s2776
        // Predicated region
        $region41: #{tpu_custom_call.1} parent=39 // pred_check
          %p2778 = pneg %p147
        $region42: #{tpu_custom_call.1} parent=39 // pred_check_branch
          %2780 = sbr.rel (%p2778) target = $region44
        $region43: #{tpu_custom_call.1} parent=39 // pred_region
          %s2782 = ssub.s32 6144, 6144
          %2783 = vsyncadd %s2774, %s2782
          %s2784 = smul.addr %s19, 48
          %s2785 = smul.addr %s2784, 128
          %s2786 = scalar_lea.hbm %s5, %s2785
          %s2787 = sshll.u32 %s2777, 4
          %s2788 = int_to_ptr.vmem [resolvable:$true] %s2787
          %2793 = dma.vmem_to_hbm [thread:$0]  %s2788, 6144, %s2786, %s2774, 128, 128, 8
        $region44: #{tpu_custom_call.1} parent=39 // pred_fallthru
          _
      $region40: #{tpu_custom_call.1} parent=5 // pred_fallthru
        _
      %p2794 = scmp.le.s32.totalorder 2, %s14
      // Predicated region
      $region45: #{tpu_custom_call.1} parent=5 // pred_check
        %p2795 = pneg %p2794
      $region46: #{tpu_custom_call.1} parent=5 // pred_check_branch
        %2797 = sbr.rel (%p2795) target = $region48
      $region47: #{tpu_custom_call.1} parent=5 // pred_region
        %s2798 = ssub.s32 %s14, 2
        // Predicated region
        $region49: #{tpu_custom_call.1} parent=47 // pred_check
          %p2799 = pneg %p153
        $region50: #{tpu_custom_call.1} parent=47 // pred_check_branch
          %2801 = sbr.rel (%p2799) target = $region52
        $region51: #{tpu_custom_call.1} parent=47 // pred_region
          %s2802 = sand.u32 %s138, 1
          %s2803 = scalar_lea.sflag [#allocation3], %s2802
          %s2804 = sand.u32 %s138, 1
          %s2805 = smul.addr %s2804, 384
          %s2806 = scalar_lea.vmem [#allocation2], %s2805
          %2807 = dma.done %s2803, 6144
        $region52: #{tpu_custom_call.1} parent=47 // pred_fallthru
          _
      $region48: #{tpu_custom_call.1} parent=5 // pred_fallthru
        _
    $region6: #{tpu_custom_call.1} parent=1 // loop_footer
      %s18 = sadd.s32 1, %s14
    $region7: #{tpu_custom_call.1} parent=1 // loop_footer_branch
      %13 = sbr.rel target = $region3
    $region8: #{tpu_custom_call.1} parent=1 // loop_exit
      _
    %2808 = vsyncpa [#allocation3], 1
    %s2809 = scalar_lea.sflag [#allocation3], 1
    %2810 = vsyncpa %s2809, 1

</llo_original>
